<compile_context>
chip_gen: v5e
topology: v5e:2x2
jax: 0.10.0
libtpu: 0.0.40
codegen_flags: <defaults>
</compile_context>

<pallas_src>
import jax
import jax.numpy as jnp
from jax import lax
from jax.experimental import pallas as pl
from jax.experimental.pallas import tpu as pltpu


def _make_gvgru3_kernel(*, pad0, n_chunks, unroll):
    """Builds the chunked-recurrence kernel with static pad-skip and unroll."""

    def kernel(x_ref, a_ref, wx2_ref, bg2_ref, omg_ref, wo_ref, bo_ref,
               out_ref, hid_ref):
        c = pl.program_id(0)
        tc = x_ref.shape[0]
        hp, bp = hid_ref.shape

        @pl.when(c == 0)
        def _init():
            hid_ref[...] = jnp.zeros_like(hid_ref)

        # Loop invariants hoisted off the serial chain.
        a = a_ref[...]            # [Hp, Hp]  folded gate weight (maybe bf16)
        wx2 = wx2_ref[...]        # [Hp, Bp]  g * w_x  (pre-broadcast)
        bg2 = bg2_ref[...]        # [Hp, Bp]  g * b_g  (pre-broadcast)
        omg = omg_ref[...]        # [1, 1]    1 - g    (splat-broadcasts in use)

        def step(t, h):
            # x_t = row t of the [Tc, Bp] block, broadcast down the sublane
            # (hidden) axis -- no xwx tensor materialized; addend is off the
            # h-dependence chain so it overlaps the MXU latency.
            xb = x_ref[pl.ds(t, 1), :]                       # [1, Bp]
            addend = xb * wx2 + bg2                          # [Hp, Bp]
            pre = jnp.dot(a, h.astype(a.dtype),
                          preferred_element_type=jnp.float32) + addend
            return jnp.maximum(pre, 0.0) + omg * h

        def run(t0, h0):
            return lax.fori_loop(t0, tc, step, h0, unroll=unroll)

        h = hid_ref[...]
        if pad0 == 0:
            h = run(0, h)
        elif n_chunks == 1:
            h = run(pad0, h)          # skip the (static) front padding
        else:
            # Only chunk 0 carries the front padding; skip it there.
            h = lax.cond(c == 0, lambda v: run(pad0, v), lambda v: run(0, v), h)
        hid_ref[...] = h

        @pl.when(c == pl.num_programs(0) - 1)
        def _finalize():
            # output Linear(H, 1) on the transposed state: [1,Hp] @ [Hp,Bp].
            out_ref[...] = (jnp.dot(wo_ref[...], h,
                                    preferred_element_type=jnp.float32)
                            + bo_ref[...])

    return kernel


def gvgru3_forward(x, gate_w, gate_b, out_w, out_b, *,
                   time_chunk=512, use_bf16_matmul=False):
    """x: [B, T] f32; gate_w: [H, 1+H]; gate_b: [H]; out_w: [1, H]; out_b: [1]."""
    B, T = x.shape
    H = gate_w.shape[0]
    f32 = jnp.float32

    Bp = ((B + 7) // 8) * 8           # batch -> lane dim of the state
    Hp = ((H + 127) // 128) * 128     # hidden -> sublane / MXU contraction dim

    if T <= time_chunk:
        Tc = T                        # single chunk: block == full time axis
    else:
        Tc = ((time_chunk + 7) // 8) * 8
    n_chunks = pl.cdiv(T, Tc)
    Tp = n_chunks * Tc
    pad0 = Tp - T                     # no-op steps, skipped inside chunk 0

    # Scalar gate g = sigmoid(output.bias); fold it into the weights.
    g = jax.nn.sigmoid(out_b.astype(f32)).reshape(())
    omg = (1.0 - g).reshape(1, 1)

    w_h = gate_w[:, :H].astype(f32)   # [H, H]  hidden part of the gate Linear
    w_x = gate_w[:, H].astype(f32)    # [H]     scalar-input column
    b_g = gate_b.astype(f32)          # [H]

    a_mat = jnp.zeros((Hp, Hp), f32).at[:H, :H].set((g * g) * w_h)
    if use_bf16_matmul:
        # TODO(synk): rounding compounds across the recurrence; validate at the
        # production sequence length before enabling bf16 MXU inputs.
        a_mat = a_mat.astype(jnp.bfloat16)
    wx2 = jnp.zeros((Hp, Bp), f32).at[:H, :].set(
        jnp.broadcast_to((g * w_x)[:, None], (H, Bp)))
    bg2 = jnp.zeros((Hp, Bp), f32).at[:H, :].set(
        jnp.broadcast_to((g * b_g)[:, None], (H, Bp)))
    wo = jnp.zeros((1, Hp), f32).at[0, :H].set(out_w.reshape(-1).astype(f32))
    bo = out_b.reshape(1, 1).astype(f32)

    # Reverse time (module walks t = T-1 .. 0), pad batch to the lane width and
    # front-pad time so chunks are uniform; padded rows are never executed.
    x_rev = x[:, ::-1].T.astype(f32)                       # [T, B]
    x_rev = jnp.pad(x_rev, ((pad0, 0), (0, Bp - B)))       # [Tp, Bp]

    kernel = _make_gvgru3_kernel(pad0=pad0, n_chunks=n_chunks,
                                 unroll=True if Tc <= 128 else 8)

    grid_spec = pltpu.PrefetchScalarGridSpec(
        num_scalar_prefetch=0,
        grid=(n_chunks,),
        in_specs=[
            pl.BlockSpec((Tc, Bp), lambda c: (c, 0)),   # x time-chunks
            pl.BlockSpec((Hp, Hp), lambda c: (0, 0)),   # A = g^2 * w_h
            pl.BlockSpec((Hp, Bp), lambda c: (0, 0)),   # g * w_x  (broadcast)
            pl.BlockSpec((Hp, Bp), lambda c: (0, 0)),   # g * b_g  (broadcast)
            pl.BlockSpec((1, 1), lambda c: (0, 0)),     # 1 - g
            pl.BlockSpec((1, Hp), lambda c: (0, 0)),    # output weight
            pl.BlockSpec((1, 1), lambda c: (0, 0)),     # output bias
        ],
        out_specs=pl.BlockSpec((1, Bp), lambda c: (0, 0)),
        scratch_shapes=[pltpu.VMEM((Hp, Bp), jnp.float32)],   # transposed state
    )

    out = pl.pallas_call(
        kernel,
        out_shape=jax.ShapeDtypeStruct((1, Bp), jnp.float32),
        grid_spec=grid_spec,
        compiler_params=pltpu.CompilerParams(
            dimension_semantics=("arbitrary",)),   # serial recurrence
    )(x_rev, a_mat, wx2, bg2, omg, wo, bo)
    return out[0, :B].reshape(B, 1)


def gvgru3_ref(x, gate_w, gate_b, out_w, out_b):
    """Pure-JAX mirror of the PyTorch forward, for verification."""
    B, T = x.shape
    H = gate_w.shape[0]
    hidden = jnp.zeros((B, H), jnp.float32)
    g = jax.nn.sigmoid(out_b)                      # [1], reset == update gate
    for time in range(T):
        xs = x[:, T - 1 - time].reshape(B, 1)
        combined2 = jnp.concatenate([g * hidden, xs], axis=1)
        hh = jax.nn.relu(combined2 @ gate_w.T + gate_b)
        hidden = g * hh + (1.0 - g) * hidden
    return hidden @ out_w.T + out_b


if __name__ == "__main__":
    B, T, H = 2, 8, 32   # input_size = 1 (the forward feeds one scalar per step)
    key = jax.random.PRNGKey(0)
    k1, k2, k3, k4, k5 = jax.random.split(key, 5)

    x = jax.random.normal(k1, (B, T), jnp.float32)

    # Deterministic, PyTorch-Linear-style uniform init.
    bound_g = 1.0 / jnp.sqrt(1.0 + H)
    gate_w = jax.random.uniform(k2, (H, 1 + H), jnp.float32, -bound_g, bound_g)
    gate_b = jax.random.uniform(k3, (H,), jnp.float32, -bound_g, bound_g)
    bound_o = 1.0 / jnp.sqrt(1.0 * H)
    out_w = jax.random.uniform(k4, (1, H), jnp.float32, -bound_o, bound_o)
    out_b = jax.random.uniform(k5, (1,), jnp.float32, -bound_o, bound_o)

    y = gvgru3_forward(x, gate_w, gate_b, out_w, out_b)
    y = jax.block_until_ready(y)

    y_ref = gvgru3_ref(x, gate_w, gate_b, out_w, out_b)
    assert y.shape == (B, 1), y.shape
    assert jnp.allclose(y, y_ref, atol=1e-5, rtol=1e-5), (y, y_ref)

    print("KERNEL_OK")
</pallas_src>

<mosaic_0001>
module attributes {stable_mosaic.version = 11 : i64} {
  func.func @kernel(%arg0: i32, %arg1: memref<8x8xf32, #tpu.memory_space<vmem>>, %arg2: memref<128x128xf32, #tpu.memory_space<vmem>>, %arg3: memref<128x8xf32, #tpu.memory_space<vmem>>, %arg4: memref<128x8xf32, #tpu.memory_space<vmem>>, %arg5: memref<1x1xf32, #tpu.memory_space<vmem>>, %arg6: memref<1x128xf32, #tpu.memory_space<vmem>>, %arg7: memref<1x1xf32, #tpu.memory_space<vmem>>, %arg8: memref<1x8xf32, #tpu.memory_space<vmem>>, %arg9: memref<128x8xf32, #tpu.memory_space<vmem>>) attributes {dimension_semantics = [#tpu.dimension_semantics<arbitrary>], iteration_bounds = array<i64: 1>, scalar_prefetch = 0 : i64, scratch_operands = 1 : i64, tpu.core_type = #tpu.core_type<tc>, window_params = [{transform_indices = @transform_0, window_bounds = array<i64: 8, 8>}, {pipeline_mode = #tpu.pipeline_mode<synchronous>, transform_indices = @transform_1, window_bounds = array<i64: 128, 128>}, {pipeline_mode = #tpu.pipeline_mode<synchronous>, transform_indices = @transform_2, window_bounds = array<i64: 128, 8>}, {pipeline_mode = #tpu.pipeline_mode<synchronous>, transform_indices = @transform_3, window_bounds = array<i64: 128, 8>}, {pipeline_mode = #tpu.pipeline_mode<synchronous>, transform_indices = @transform_4, window_bounds = array<i64: 1, 1>}, {pipeline_mode = #tpu.pipeline_mode<synchronous>, transform_indices = @transform_5, window_bounds = array<i64: 1, 128>}, {pipeline_mode = #tpu.pipeline_mode<synchronous>, transform_indices = @transform_6, window_bounds = array<i64: 1, 1>}, {pipeline_mode = #tpu.pipeline_mode<synchronous>, transform_indices = @transform_7, window_bounds = array<i64: 1, 8>}]} {
    %c0_i32 = arith.constant 0 : i32
    %0 = arith.cmpi eq, %arg0, %c0_i32 : i32
    %1 = arith.extui %0 : i1 to i32
    %c0_i32_0 = arith.constant 0 : i32
    %2 = arith.cmpi ne, %1, %c0_i32_0 : i32
    scf.if %2 {
      %cst_38 = arith.constant 0.000000e+00 : f32
      %108 = vector.broadcast %cst_38 : f32 to vector<128x8xf32>
      %c0_39 = arith.constant 0 : index
      %c0_40 = arith.constant 0 : index
      %109 = vector.load %arg9[%c0_39, %c0_40] : memref<128x8xf32, #tpu.memory_space<vmem>>, vector<128x8xf32>
      tpu.vector_store %arg9[%c0_39, %c0_40], %108 {strides = array<i32>} : memref<128x8xf32, #tpu.memory_space<vmem>>, vector<128x8xf32>,
    } else {
    }
    %c0 = arith.constant 0 : index
    %c0_1 = arith.constant 0 : index
    %3 = vector.load %arg2[%c0, %c0_1] : memref<128x128xf32, #tpu.memory_space<vmem>>, vector<128x128xf32>
    %c0_2 = arith.constant 0 : index
    %c0_3 = arith.constant 0 : index
    %4 = vector.load %arg3[%c0_2, %c0_3] : memref<128x8xf32, #tpu.memory_space<vmem>>, vector<128x8xf32>
    %c0_4 = arith.constant 0 : index
    %c0_5 = arith.constant 0 : index
    %5 = vector.load %arg4[%c0_4, %c0_5] : memref<128x8xf32, #tpu.memory_space<vmem>>, vector<128x8xf32>
    %c0_6 = arith.constant 0 : index
    %c0_7 = arith.constant 0 : index
    %6 = vector.load %arg5[%c0_6, %c0_7] : memref<1x1xf32, #tpu.memory_space<vmem>>, vector<1x1xf32>
    %c0_8 = arith.constant 0 : index
    %c0_9 = arith.constant 0 : index
    %7 = vector.load %arg9[%c0_8, %c0_9] : memref<128x8xf32, #tpu.memory_space<vmem>>, vector<128x8xf32>
    %c0_i32_10 = arith.constant 0 : i32
    %8 = arith.index_cast %c0_i32_10 : i32 to index
    %c0_11 = arith.constant 0 : index
    %9 = vector.load %arg1[%8, %c0_11] : memref<8x8xf32, #tpu.memory_space<vmem>>, vector<1x8xf32>
    %10 = vector.broadcast %9 : vector<1x8xf32> to vector<128x8xf32>
    %11 = arith.mulf %10, %4 : vector<128x8xf32>
    %12 = arith.addf %11, %5 : vector<128x8xf32>
    %cst = arith.constant dense<0.000000e+00> : vector<128x8xf32>
    %13 = tpu.matmul %3, %7, %cst {dimension_numbers = #tpu.dot_dimension_numbers<[1], [0], [0], [1], [0, 0, 1, 1], [], []>} : vector<128x128xf32>, vector<128x8xf32>, vector<128x8xf32> -> vector<128x8xf32>
    %14 = arith.addf %13, %12 : vector<128x8xf32>
    %cst_12 = arith.constant 0.000000e+00 : f32
    %15 = vector.broadcast %cst_12 : f32 to vector<128x8xf32>
    %16 = arith.maximumf %14, %15 : vector<128x8xf32>
    %17 = vector.broadcast %6 : vector<1x1xf32> to vector<128x8xf32>
    %18 = arith.mulf %17, %7 : vector<128x8xf32>
    %19 = arith.addf %16, %18 : vector<128x8xf32>
    %c1_i32 = arith.constant 1 : i32
    %20 = arith.index_cast %c1_i32 : i32 to index
    %c0_13 = arith.constant 0 : index
    %21 = vector.load %arg1[%20, %c0_13] : memref<8x8xf32, #tpu.memory_space<vmem>>, vector<1x8xf32>
    %22 = vector.broadcast %21 : vector<1x8xf32> to vector<128x8xf32>
    %23 = arith.mulf %22, %4 : vector<128x8xf32>
    %24 = arith.addf %23, %5 : vector<128x8xf32>
    %cst_14 = arith.constant dense<0.000000e+00> : vector<128x8xf32>
    %25 = tpu.matmul %3, %19, %cst_14 {dimension_numbers = #tpu.dot_dimension_numbers<[1], [0], [0], [1], [0, 0, 1, 1], [], []>} : vector<128x128xf32>, vector<128x8xf32>, vector<128x8xf32> -> vector<128x8xf32>
    %26 = arith.addf %25, %24 : vector<128x8xf32>
    %cst_15 = arith.constant 0.000000e+00 : f32
    %27 = vector.broadcast %cst_15 : f32 to vector<128x8xf32>
    %28 = arith.maximumf %26, %27 : vector<128x8xf32>
    %29 = vector.broadcast %6 : vector<1x1xf32> to vector<128x8xf32>
    %30 = arith.mulf %29, %19 : vector<128x8xf32>
    %31 = arith.addf %28, %30 : vector<128x8xf32>
    %c2_i32 = arith.constant 2 : i32
    %32 = arith.index_cast %c2_i32 : i32 to index
    %c0_16 = arith.constant 0 : index
    %33 = vector.load %arg1[%32, %c0_16] : memref<8x8xf32, #tpu.memory_space<vmem>>, vector<1x8xf32>
    %34 = vector.broadcast %33 : vector<1x8xf32> to vector<128x8xf32>
    %35 = arith.mulf %34, %4 : vector<128x8xf32>
    %36 = arith.addf %35, %5 : vector<128x8xf32>
    %cst_17 = arith.constant dense<0.000000e+00> : vector<128x8xf32>
    %37 = tpu.matmul %3, %31, %cst_17 {dimension_numbers = #tpu.dot_dimension_numbers<[1], [0], [0], [1], [0, 0, 1, 1], [], []>} : vector<128x128xf32>, vector<128x8xf32>, vector<128x8xf32> -> vector<128x8xf32>
    %38 = arith.addf %37, %36 : vector<128x8xf32>
    %cst_18 = arith.constant 0.000000e+00 : f32
    %39 = vector.broadcast %cst_18 : f32 to vector<128x8xf32>
    %40 = arith.maximumf %38, %39 : vector<128x8xf32>
    %41 = vector.broadcast %6 : vector<1x1xf32> to vector<128x8xf32>
    %42 = arith.mulf %41, %31 : vector<128x8xf32>
    %43 = arith.addf %40, %42 : vector<128x8xf32>
    %c3_i32 = arith.constant 3 : i32
    %44 = arith.index_cast %c3_i32 : i32 to index
    %c0_19 = arith.constant 0 : index
    %45 = vector.load %arg1[%44, %c0_19] : memref<8x8xf32, #tpu.memory_space<vmem>>, vector<1x8xf32>
    %46 = vector.broadcast %45 : vector<1x8xf32> to vector<128x8xf32>
    %47 = arith.mulf %46, %4 : vector<128x8xf32>
    %48 = arith.addf %47, %5 : vector<128x8xf32>
    %cst_20 = arith.constant dense<0.000000e+00> : vector<128x8xf32>
    %49 = tpu.matmul %3, %43, %cst_20 {dimension_numbers = #tpu.dot_dimension_numbers<[1], [0], [0], [1], [0, 0, 1, 1], [], []>} : vector<128x128xf32>, vector<128x8xf32>, vector<128x8xf32> -> vector<128x8xf32>
    %50 = arith.addf %49, %48 : vector<128x8xf32>
    %cst_21 = arith.constant 0.000000e+00 : f32
    %51 = vector.broadcast %cst_21 : f32 to vector<128x8xf32>
    %52 = arith.maximumf %50, %51 : vector<128x8xf32>
    %53 = vector.broadcast %6 : vector<1x1xf32> to vector<128x8xf32>
    %54 = arith.mulf %53, %43 : vector<128x8xf32>
    %55 = arith.addf %52, %54 : vector<128x8xf32>
    %c4_i32 = arith.constant 4 : i32
    %56 = arith.index_cast %c4_i32 : i32 to index
    %c0_22 = arith.constant 0 : index
    %57 = vector.load %arg1[%56, %c0_22] : memref<8x8xf32, #tpu.memory_space<vmem>>, vector<1x8xf32>
    %58 = vector.broadcast %57 : vector<1x8xf32> to vector<128x8xf32>
    %59 = arith.mulf %58, %4 : vector<128x8xf32>
    %60 = arith.addf %59, %5 : vector<128x8xf32>
    %cst_23 = arith.constant dense<0.000000e+00> : vector<128x8xf32>
    %61 = tpu.matmul %3, %55, %cst_23 {dimension_numbers = #tpu.dot_dimension_numbers<[1], [0], [0], [1], [0, 0, 1, 1], [], []>} : vector<128x128xf32>, vector<128x8xf32>, vector<128x8xf32> -> vector<128x8xf32>
    %62 = arith.addf %61, %60 : vector<128x8xf32>
    %cst_24 = arith.constant 0.000000e+00 : f32
    %63 = vector.broadcast %cst_24 : f32 to vector<128x8xf32>
    %64 = arith.maximumf %62, %63 : vector<128x8xf32>
    %65 = vector.broadcast %6 : vector<1x1xf32> to vector<128x8xf32>
    %66 = arith.mulf %65, %55 : vector<128x8xf32>
    %67 = arith.addf %64, %66 : vector<128x8xf32>
    %c5_i32 = arith.constant 5 : i32
    %68 = arith.index_cast %c5_i32 : i32 to index
    %c0_25 = arith.constant 0 : index
    %69 = vector.load %arg1[%68, %c0_25] : memref<8x8xf32, #tpu.memory_space<vmem>>, vector<1x8xf32>
    %70 = vector.broadcast %69 : vector<1x8xf32> to vector<128x8xf32>
    %71 = arith.mulf %70, %4 : vector<128x8xf32>
    %72 = arith.addf %71, %5 : vector<128x8xf32>
    %cst_26 = arith.constant dense<0.000000e+00> : vector<128x8xf32>
    %73 = tpu.matmul %3, %67, %cst_26 {dimension_numbers = #tpu.dot_dimension_numbers<[1], [0], [0], [1], [0, 0, 1, 1], [], []>} : vector<128x128xf32>, vector<128x8xf32>, vector<128x8xf32> -> vector<128x8xf32>
    %74 = arith.addf %73, %72 : vector<128x8xf32>
    %cst_27 = arith.constant 0.000000e+00 : f32
    %75 = vector.broadcast %cst_27 : f32 to vector<128x8xf32>
    %76 = arith.maximumf %74, %75 : vector<128x8xf32>
    %77 = vector.broadcast %6 : vector<1x1xf32> to vector<128x8xf32>
    %78 = arith.mulf %77, %67 : vector<128x8xf32>
    %79 = arith.addf %76, %78 : vector<128x8xf32>
    %c6_i32 = arith.constant 6 : i32
    %80 = arith.index_cast %c6_i32 : i32 to index
    %c0_28 = arith.constant 0 : index
    %81 = vector.load %arg1[%80, %c0_28] : memref<8x8xf32, #tpu.memory_space<vmem>>, vector<1x8xf32>
    %82 = vector.broadcast %81 : vector<1x8xf32> to vector<128x8xf32>
    %83 = arith.mulf %82, %4 : vector<128x8xf32>
    %84 = arith.addf %83, %5 : vector<128x8xf32>
    %cst_29 = arith.constant dense<0.000000e+00> : vector<128x8xf32>
    %85 = tpu.matmul %3, %79, %cst_29 {dimension_numbers = #tpu.dot_dimension_numbers<[1], [0], [0], [1], [0, 0, 1, 1], [], []>} : vector<128x128xf32>, vector<128x8xf32>, vector<128x8xf32> -> vector<128x8xf32>
    %86 = arith.addf %85, %84 : vector<128x8xf32>
    %cst_30 = arith.constant 0.000000e+00 : f32
    %87 = vector.broadcast %cst_30 : f32 to vector<128x8xf32>
    %88 = arith.maximumf %86, %87 : vector<128x8xf32>
    %89 = vector.broadcast %6 : vector<1x1xf32> to vector<128x8xf32>
    %90 = arith.mulf %89, %79 : vector<128x8xf32>
    %91 = arith.addf %88, %90 : vector<128x8xf32>
    %c7_i32 = arith.constant 7 : i32
    %92 = arith.index_cast %c7_i32 : i32 to index
    %c0_31 = arith.constant 0 : index
    %93 = vector.load %arg1[%92, %c0_31] : memref<8x8xf32, #tpu.memory_space<vmem>>, vector<1x8xf32>
    %94 = vector.broadcast %93 : vector<1x8xf32> to vector<128x8xf32>
    %95 = arith.mulf %94, %4 : vector<128x8xf32>
    %96 = arith.addf %95, %5 : vector<128x8xf32>
    %cst_32 = arith.constant dense<0.000000e+00> : vector<128x8xf32>
    %97 = tpu.matmul %3, %91, %cst_32 {dimension_numbers = #tpu.dot_dimension_numbers<[1], [0], [0], [1], [0, 0, 1, 1], [], []>} : vector<128x128xf32>, vector<128x8xf32>, vector<128x8xf32> -> vector<128x8xf32>
    %98 = arith.addf %97, %96 : vector<128x8xf32>
    %cst_33 = arith.constant 0.000000e+00 : f32
    %99 = vector.broadcast %cst_33 : f32 to vector<128x8xf32>
    %100 = arith.maximumf %98, %99 : vector<128x8xf32>
    %101 = vector.broadcast %6 : vector<1x1xf32> to vector<128x8xf32>
    %102 = arith.mulf %101, %91 : vector<128x8xf32>
    %103 = arith.addf %100, %102 : vector<128x8xf32>
    %c8_i32 = arith.constant 8 : i32
    %c0_34 = arith.constant 0 : index
    %c0_35 = arith.constant 0 : index
    %104 = vector.load %arg9[%c0_34, %c0_35] : memref<128x8xf32, #tpu.memory_space<vmem>>, vector<128x8xf32>
    tpu.vector_store %arg9[%c0_34, %c0_35], %103 {strides = array<i32>} : memref<128x8xf32, #tpu.memory_space<vmem>>, vector<128x8xf32>,
    %c0_i32_36 = arith.constant 0 : i32
    %105 = arith.cmpi eq, %arg0, %c0_i32_36 : i32
    %106 = arith.extui %105 : i1 to i32
    %c0_i32_37 = arith.constant 0 : i32
    %107 = arith.cmpi ne, %106, %c0_i32_37 : i32
    scf.if %107 {
      %c0_38 = arith.constant 0 : index
      %c0_39 = arith.constant 0 : index
      %108 = vector.load %arg6[%c0_38, %c0_39] : memref<1x128xf32, #tpu.memory_space<vmem>>, vector<1x128xf32>
      %cst_40 = arith.constant dense<0.000000e+00> : vector<1x8xf32>
      %109 = tpu.matmul %108, %103, %cst_40 {dimension_numbers = #tpu.dot_dimension_numbers<[1], [0], [0], [1], [0, 0, 1, 1], [], []>} : vector<1x128xf32>, vector<128x8xf32>, vector<1x8xf32> -> vector<1x8xf32>
      %c0_41 = arith.constant 0 : index
      %c0_42 = arith.constant 0 : index
      %110 = vector.load %arg7[%c0_41, %c0_42] : memref<1x1xf32, #tpu.memory_space<vmem>>, vector<1x1xf32>
      %111 = vector.broadcast %110 : vector<1x1xf32> to vector<1x8xf32>
      %112 = arith.addf %109, %111 : vector<1x8xf32>
      %c0_43 = arith.constant 0 : index
      %c0_44 = arith.constant 0 : index
      %113 = vector.load %arg8[%c0_43, %c0_44] : memref<1x8xf32, #tpu.memory_space<vmem>>, vector<1x8xf32>
      tpu.vector_store %arg8[%c0_43, %c0_44], %112 {strides = array<i32>} : memref<1x8xf32, #tpu.memory_space<vmem>>, vector<1x8xf32>,
    } else {
    }
    return
  }
  func.func @transform_0(%arg0: i32) -> (i32, i32) {
    %c0_i32 = arith.constant 0 : i32
    %c0_i32_0 = arith.constant 0 : i32
    return %arg0, %c0_i32 : i32, i32
  }
  func.func @transform_1(%arg0: i32) -> (i32, i32) {
    %c0_i32 = arith.constant 0 : i32
    %c0_i32_0 = arith.constant 0 : i32
    %c0_i32_1 = arith.constant 0 : i32
    return %c0_i32, %c0_i32_0 : i32, i32
  }
  func.func @transform_2(%arg0: i32) -> (i32, i32) {
    %c0_i32 = arith.constant 0 : i32
    %c0_i32_0 = arith.constant 0 : i32
    %c0_i32_1 = arith.constant 0 : i32
    return %c0_i32, %c0_i32_0 : i32, i32
  }
  func.func @transform_3(%arg0: i32) -> (i32, i32) {
    %c0_i32 = arith.constant 0 : i32
    %c0_i32_0 = arith.constant 0 : i32
    %c0_i32_1 = arith.constant 0 : i32
    return %c0_i32, %c0_i32_0 : i32, i32
  }
  func.func @transform_4(%arg0: i32) -> (i32, i32) {
    %c0_i32 = arith.constant 0 : i32
    %c0_i32_0 = arith.constant 0 : i32
    %c0_i32_1 = arith.constant 0 : i32
    return %c0_i32, %c0_i32_0 : i32, i32
  }
  func.func @transform_5(%arg0: i32) -> (i32, i32) {
    %c0_i32 = arith.constant 0 : i32
    %c0_i32_0 = arith.constant 0 : i32
    %c0_i32_1 = arith.constant 0 : i32
    return %c0_i32, %c0_i32_0 : i32, i32
  }
  func.func @transform_6(%arg0: i32) -> (i32, i32) {
    %c0_i32 = arith.constant 0 : i32
    %c0_i32_0 = arith.constant 0 : i32
    %c0_i32_1 = arith.constant 0 : i32
    return %c0_i32, %c0_i32_0 : i32, i32
  }
  func.func @transform_7(%arg0: i32) -> (i32, i32) {
    %c0_i32 = arith.constant 0 : i32
    %c0_i32_0 = arith.constant 0 : i32
    %c0_i32_1 = arith.constant 0 : i32
    return %c0_i32, %c0_i32_0 : i32, i32
  }
}

</mosaic_0001>

<llo_original>
// kernel: tpu_custom_call.1
$region0: #{tpu_custom_call.1}
  #allocation0 [shape = 'u32[]', space=smem, size = 0x4, offset = 0x4, fixed_abs, tag = 'smem constant byte address 0x4 - core index']
  #allocation1 [shape = 'u32[72,128]{1,0:T(1,128)}', space=vmem, size = 0x9000, scoped, tag = 'internal scratch']
  #allocation2 [shape = 'f32[128,8]{1,0:T(8,128)}', space=vmem, size = 0x10000, scoped, tag = 'scratch operand']
  #allocation3 [shape = 'f32[1,1]{1,0:T(1,128)S(1)}', space=vmem, size = 0x200, scoped, tag = 'scoped memory for tpu_custom_call.1']
  #allocation4 [shape = 'f32[1,1]{1,0:T(1,128)S(1)}', space=vmem, size = 0x200, scoped, tag = 'scoped memory for tpu_custom_call.1']
  %s0 = inlined_call_operand.vmem [shape: f32[8,8], index: 0, kind: input, shape index: {}]
  %s1 = inlined_call_operand.vmem [shape: f32[128,128], index: 1, kind: input, shape index: {}]
  %s2 = inlined_call_operand.vmem [shape: f32[128,8], index: 2, kind: input, shape index: {}]
  %s3 = inlined_call_operand.vmem [shape: f32[128,8], index: 3, kind: input, shape index: {}]
  %s4 = inlined_call_operand.<no memory space> [shape: f32[1,1], index: 4, kind: input, shape index: {}]
  %s5 = inlined_call_operand.vmem [shape: f32[1,128], index: 5, kind: input, shape index: {}]
  %s6 = inlined_call_operand.<no memory space> [shape: f32[1,1], index: 6, kind: input, shape index: {}]
  %s7 = inlined_call_operand.hbm [shape: f32[1,8], index: 7, kind: output, shape index: {}]
  %s8 = sld [smem:[#allocation0]]
  $region46: #{tpu_custom_call.1} parent=0
    _
  %s10 = ssub.s32 1, %s8
  %s11 = scalar_select 0, %s10, %s8
  %v12 = vstv %s4
  %13 = vst [vmem:[#allocation3] sm:$0x1] %v12
  %v14 = vstv %s6
  %15 = vst [vmem:[#allocation4] sm:$0x1] %v14
  $region1: #{tpu_custom_call.1} parent=0
    #allocation5 [shape = 'u8[512]{0}', space=vmem, size = 0x400, scoped, tag = 'output window, operand 0, single buffered']
    #allocation6 [shape = 's32[1]{0}', space=sflag, size = 0x4, scoped, tag = 'scoped memory for tpu_custom_call.1']
    %16 = vsyncpa [#allocation6], 0
    // Predicated region
    $region2: #{tpu_custom_call.1} parent=1 // pred_check
      _
    $region3: #{tpu_custom_call.1} parent=1 // pred_check_branch
      %18 = sbr.rel (0) target = $region5
    $region4: #{tpu_custom_call.1} parent=1 // pred_region
      _
    $region5: #{tpu_custom_call.1} parent=1 // pred_fallthru
      _
    // Predicated region
    $region6: #{tpu_custom_call.1} parent=1 // pred_check
      _
    $region7: #{tpu_custom_call.1} parent=1 // pred_check_branch
      %20 = sbr.rel (0) target = $region9
    $region8: #{tpu_custom_call.1} parent=1 // pred_region
      _
    $region9: #{tpu_custom_call.1} parent=1 // pred_fallthru
      _
    // Predicated region
    $region10: #{tpu_custom_call.1} parent=1 // pred_check
      _
    $region11: #{tpu_custom_call.1} parent=1 // pred_check_branch
      %22 = sbr.rel (0) target = $region13
    $region12: #{tpu_custom_call.1} parent=1 // pred_region
      _
    $region13: #{tpu_custom_call.1} parent=1 // pred_fallthru
      _
    // Predicated region
    $region14: #{tpu_custom_call.1} parent=1 // pred_check
      _
    $region15: #{tpu_custom_call.1} parent=1 // pred_check_branch
      %24 = sbr.rel (0) target = $region17
    $region16: #{tpu_custom_call.1} parent=1 // pred_region
      _
    $region17: #{tpu_custom_call.1} parent=1 // pred_fallthru
      _
    // Predicated region
    $region18: #{tpu_custom_call.1} parent=1 // pred_check
      _
    $region19: #{tpu_custom_call.1} parent=1 // pred_check_branch
      %26 = sbr.rel (0) target = $region21
    $region20: #{tpu_custom_call.1} parent=1 // pred_region
      _
    $region21: #{tpu_custom_call.1} parent=1 // pred_fallthru
      _
    // Predicated region
    $region22: #{tpu_custom_call.1} parent=1 // pred_check
      _
    $region23: #{tpu_custom_call.1} parent=1 // pred_check_branch
      %28 = sbr.rel (0) target = $region25
    $region24: #{tpu_custom_call.1} parent=1 // pred_region
      _
    $region25: #{tpu_custom_call.1} parent=1 // pred_fallthru
      _
    // Predicated region
    $region26: #{tpu_custom_call.1} parent=1 // pred_check
      _
    $region27: #{tpu_custom_call.1} parent=1 // pred_check_branch
      %30 = sbr.rel (0) target = $region29
    $region28: #{tpu_custom_call.1} parent=1 // pred_region
      _
    $region29: #{tpu_custom_call.1} parent=1 // pred_fallthru
      _
    %p31 = scmp.eq.s32.totalorder 0, 0
    // Predicated region
    $region30: #{tpu_custom_call.1} parent=1 // pred_check
      %p32 = pneg %p31
    $region31: #{tpu_custom_call.1} parent=1 // pred_check_branch
      %34 = sbr.rel (%p32) target = $region33
    $region32: #{tpu_custom_call.1} parent=1 // pred_region
      %vm35 = vcmask 64512
      %36 = vst.msk [vmem:[#allocation2] sm:$0xff] %vm35, 0.0
      %37 = vst.msk [vmem:[#allocation2 + $0x8] sm:$0xff] %vm35, 0.0
      %38 = vst.msk [vmem:[#allocation2 + $0x10] sm:$0xff] %vm35, 0.0
      %39 = vst.msk [vmem:[#allocation2 + $0x18] sm:$0xff] %vm35, 0.0
      %40 = vst.msk [vmem:[#allocation2 + $0x20] sm:$0xff] %vm35, 0.0
      %41 = vst.msk [vmem:[#allocation2 + $0x28] sm:$0xff] %vm35, 0.0
      %42 = vst.msk [vmem:[#allocation2 + $0x30] sm:$0xff] %vm35, 0.0
      %43 = vst.msk [vmem:[#allocation2 + $0x38] sm:$0xff] %vm35, 0.0
      %44 = vst.msk [vmem:[#allocation2 + $0x40] sm:$0xff] %vm35, 0.0
      %45 = vst.msk [vmem:[#allocation2 + $0x48] sm:$0xff] %vm35, 0.0
      %46 = vst.msk [vmem:[#allocation2 + $0x50] sm:$0xff] %vm35, 0.0
      %47 = vst.msk [vmem:[#allocation2 + $0x58] sm:$0xff] %vm35, 0.0
      %48 = vst.msk [vmem:[#allocation2 + $0x60] sm:$0xff] %vm35, 0.0
      %49 = vst.msk [vmem:[#allocation2 + $0x68] sm:$0xff] %vm35, 0.0
      %50 = vst.msk [vmem:[#allocation2 + $0x70] sm:$0xff] %vm35, 0.0
      %51 = vst.msk [vmem:[#allocation2 + $0x78] sm:$0xff] %vm35, 0.0
    $region33: #{tpu_custom_call.1} parent=1 // pred_fallthru
      _
    %v52 = vld [vmem:[%s1] sm:$0xff]
    %v53 = vld [vmem:[%s1 + $0x8] sm:$0xff]
    %v54 = vld [vmem:[%s1 + $0x10] sm:$0xff]
    %v55 = vld [vmem:[%s1 + $0x18] sm:$0xff]
    %v56 = vld [vmem:[%s1 + $0x20] sm:$0xff]
    %v57 = vld [vmem:[%s1 + $0x28] sm:$0xff]
    %v58 = vld [vmem:[%s1 + $0x30] sm:$0xff]
    %v59 = vld [vmem:[%s1 + $0x38] sm:$0xff]
    %v60 = vld [vmem:[%s1 + $0x40] sm:$0xff]
    %v61 = vld [vmem:[%s1 + $0x48] sm:$0xff]
    %v62 = vld [vmem:[%s1 + $0x50] sm:$0xff]
    %v63 = vld [vmem:[%s1 + $0x58] sm:$0xff]
    %v64 = vld [vmem:[%s1 + $0x60] sm:$0xff]
    %v65 = vld [vmem:[%s1 + $0x68] sm:$0xff]
    %v66 = vld [vmem:[%s1 + $0x70] sm:$0xff]
    %v67 = vld [vmem:[%s1 + $0x78] sm:$0xff]
    %v68 = vld [vmem:[%s2] sm:$0xff]
    %v69 = vld [vmem:[%s2 + $0x8] sm:$0xff]
    %v70 = vld [vmem:[%s2 + $0x10] sm:$0xff]
    %v71 = vld [vmem:[%s2 + $0x18] sm:$0xff]
    %v72 = vld [vmem:[%s2 + $0x20] sm:$0xff]
    %v73 = vld [vmem:[%s2 + $0x28] sm:$0xff]
    %v74 = vld [vmem:[%s2 + $0x30] sm:$0xff]
    %v75 = vld [vmem:[%s2 + $0x38] sm:$0xff]
    %v76 = vld [vmem:[%s2 + $0x40] sm:$0xff]
    %v77 = vld [vmem:[%s2 + $0x48] sm:$0xff]
    %v78 = vld [vmem:[%s2 + $0x50] sm:$0xff]
    %v79 = vld [vmem:[%s2 + $0x58] sm:$0xff]
    %v80 = vld [vmem:[%s2 + $0x60] sm:$0xff]
    %v81 = vld [vmem:[%s2 + $0x68] sm:$0xff]
    %v82 = vld [vmem:[%s2 + $0x70] sm:$0xff]
    %v83 = vld [vmem:[%s2 + $0x78] sm:$0xff]
    %v84 = vld [vmem:[%s3] sm:$0xff]
    %v85 = vld [vmem:[%s3 + $0x8] sm:$0xff]
    %v86 = vld [vmem:[%s3 + $0x10] sm:$0xff]
    %v87 = vld [vmem:[%s3 + $0x18] sm:$0xff]
    %v88 = vld [vmem:[%s3 + $0x20] sm:$0xff]
    %v89 = vld [vmem:[%s3 + $0x28] sm:$0xff]
    %v90 = vld [vmem:[%s3 + $0x30] sm:$0xff]
    %v91 = vld [vmem:[%s3 + $0x38] sm:$0xff]
    %v92 = vld [vmem:[%s3 + $0x40] sm:$0xff]
    %v93 = vld [vmem:[%s3 + $0x48] sm:$0xff]
    %v94 = vld [vmem:[%s3 + $0x50] sm:$0xff]
    %v95 = vld [vmem:[%s3 + $0x58] sm:$0xff]
    %v96 = vld [vmem:[%s3 + $0x60] sm:$0xff]
    %v97 = vld [vmem:[%s3 + $0x68] sm:$0xff]
    %v98 = vld [vmem:[%s3 + $0x70] sm:$0xff]
    %v99 = vld [vmem:[%s3 + $0x78] sm:$0xff]
    %v100 = vld [vmem:[#allocation3] sm:$0x1]
    %v101 = vld [vmem:[#allocation2] sm:$0xff]
    %v102 = vld [vmem:[#allocation2 + $0x8] sm:$0xff]
    %v103 = vld [vmem:[#allocation2 + $0x10] sm:$0xff]
    %v104 = vld [vmem:[#allocation2 + $0x18] sm:$0xff]
    %v105 = vld [vmem:[#allocation2 + $0x20] sm:$0xff]
    %v106 = vld [vmem:[#allocation2 + $0x28] sm:$0xff]
    %v107 = vld [vmem:[#allocation2 + $0x30] sm:$0xff]
    %v108 = vld [vmem:[#allocation2 + $0x38] sm:$0xff]
    %v109 = vld [vmem:[#allocation2 + $0x40] sm:$0xff]
    %v110 = vld [vmem:[#allocation2 + $0x48] sm:$0xff]
    %v111 = vld [vmem:[#allocation2 + $0x50] sm:$0xff]
    %v112 = vld [vmem:[#allocation2 + $0x58] sm:$0xff]
    %v113 = vld [vmem:[#allocation2 + $0x60] sm:$0xff]
    %v114 = vld [vmem:[#allocation2 + $0x68] sm:$0xff]
    %v115 = vld [vmem:[#allocation2 + $0x70] sm:$0xff]
    %v116 = vld [vmem:[#allocation2 + $0x78] sm:$0xff]
    %v117 = vld [vmem:[%s0] sm:$0x1]
    %v118 = vperm.slane %v117, 0
    %v119 = vmul.f32 %v118, %v68
    %v120 = vmul.f32 %v118, %v69
    %v121 = vmul.f32 %v118, %v70
    %v122 = vmul.f32 %v118, %v71
    %v123 = vmul.f32 %v118, %v72
    %v124 = vmul.f32 %v118, %v73
    %v125 = vmul.f32 %v118, %v74
    %v126 = vmul.f32 %v118, %v75
    %v127 = vmul.f32 %v118, %v76
    %v128 = vmul.f32 %v118, %v77
    %v129 = vmul.f32 %v118, %v78
    %v130 = vmul.f32 %v118, %v79
    %v131 = vmul.f32 %v118, %v80
    %v132 = vmul.f32 %v118, %v81
    %v133 = vmul.f32 %v118, %v82
    %v134 = vmul.f32 %v118, %v83
    %v135 = vadd.f32 %v119, %v84
    %v136 = vadd.f32 %v120, %v85
    %v137 = vadd.f32 %v121, %v86
    %v138 = vadd.f32 %v122, %v87
    %v139 = vadd.f32 %v123, %v88
    %v140 = vadd.f32 %v124, %v89
    %v141 = vadd.f32 %v125, %v90
    %v142 = vadd.f32 %v126, %v91
    %v143 = vadd.f32 %v127, %v92
    %v144 = vadd.f32 %v128, %v93
    %v145 = vadd.f32 %v129, %v94
    %v146 = vadd.f32 %v130, %v95
    %v147 = vadd.f32 %v131, %v96
    %v148 = vadd.f32 %v132, %v97
    %v149 = vadd.f32 %v133, %v98
    %v150 = vadd.f32 %v134, %v99
    %151 = vmatpush.msra.mxu0 %v116
    %152 = vmatpush.msra.mxu0 %v115
    %153 = vmatpush.msra.mxu0 %v114
    %154 = vmatpush.msra.mxu0 %v113
    %155 = vmatpush.msra.mxu0 %v112
    %156 = vmatpush.msra.mxu0 %v111
    %157 = vmatpush.msra.mxu0 %v110
    %158 = vmatpush.msra.mxu0 %v109
    %159 = vmatpush.msra.mxu0 %v108
    %160 = vmatpush.msra.mxu0 %v107
    %161 = vmatpush.msra.mxu0 %v106
    %162 = vmatpush.msra.mxu0 %v105
    %163 = vmatpush.msra.mxu0 %v104
    %164 = vmatpush.msra.mxu0 %v103
    %165 = vmatpush.msra.mxu0 %v102
    %166 = vmatpush.msra.mxu0 %v101
    %167 = vmatmul.f32.gmra.mxu0 %v52
    %v168 = vpop.f32.mrf.mxu0
    %v169 = vadd.f32 %v135, %v168
    %170 = vmatmul.f32.gmra.mxu0 %v53
    %v171 = vpop.f32.mrf.mxu0
    %v172 = vadd.f32 %v136, %v171
    %173 = vmatmul.f32.gmra.mxu0 %v54
    %v174 = vpop.f32.mrf.mxu0
    %v175 = vadd.f32 %v137, %v174
    %176 = vmatmul.f32.gmra.mxu0 %v55
    %v177 = vpop.f32.mrf.mxu0
    %v178 = vadd.f32 %v138, %v177
    %179 = vmatmul.f32.gmra.mxu0 %v56
    %v180 = vpop.f32.mrf.mxu0
    %v181 = vadd.f32 %v139, %v180
    %182 = vmatmul.f32.gmra.mxu0 %v57
    %v183 = vpop.f32.mrf.mxu0
    %v184 = vadd.f32 %v140, %v183
    %185 = vmatmul.f32.gmra.mxu0 %v58
    %v186 = vpop.f32.mrf.mxu0
    %v187 = vadd.f32 %v141, %v186
    %188 = vmatmul.f32.gmra.mxu0 %v59
    %v189 = vpop.f32.mrf.mxu0
    %v190 = vadd.f32 %v142, %v189
    %191 = vmatmul.f32.gmra.mxu0 %v60
    %v192 = vpop.f32.mrf.mxu0
    %v193 = vadd.f32 %v143, %v192
    %194 = vmatmul.f32.gmra.mxu0 %v61
    %v195 = vpop.f32.mrf.mxu0
    %v196 = vadd.f32 %v144, %v195
    %197 = vmatmul.f32.gmra.mxu0 %v62
    %v198 = vpop.f32.mrf.mxu0
    %v199 = vadd.f32 %v145, %v198
    %200 = vmatmul.f32.gmra.mxu0 %v63
    %v201 = vpop.f32.mrf.mxu0
    %v202 = vadd.f32 %v146, %v201
    %203 = vmatmul.f32.gmra.mxu0 %v64
    %v204 = vpop.f32.mrf.mxu0
    %v205 = vadd.f32 %v147, %v204
    %206 = vmatmul.f32.gmra.mxu0 %v65
    %v207 = vpop.f32.mrf.mxu0
    %v208 = vadd.f32 %v148, %v207
    %209 = vmatmul.f32.gmra.mxu0 %v66
    %v210 = vpop.f32.mrf.mxu0
    %v211 = vadd.f32 %v149, %v210
    %212 = vmatmul.f32.gmra.mxu0 %v67
    %v213 = vpop.f32.mrf.mxu0
    %v214 = vadd.f32 %v150, %v213
    %215 = vdwg.mxu0
    %v216 = vmax.f32 %v169, 0.0
    %v217 = vmax.f32 %v172, 0.0
    %v218 = vmax.f32 %v175, 0.0
    %v219 = vmax.f32 %v178, 0.0
    %v220 = vmax.f32 %v181, 0.0
    %v221 = vmax.f32 %v184, 0.0
    %v222 = vmax.f32 %v187, 0.0
    %v223 = vmax.f32 %v190, 0.0
    %v224 = vmax.f32 %v193, 0.0
    %v225 = vmax.f32 %v196, 0.0
    %v226 = vmax.f32 %v199, 0.0
    %v227 = vmax.f32 %v202, 0.0
    %v228 = vmax.f32 %v205, 0.0
    %v229 = vmax.f32 %v208, 0.0
    %v230 = vmax.f32 %v211, 0.0
    %v231 = vmax.f32 %v214, 0.0
    %v233 = vperm.slane %v100, 0
    %234 = vset.pattern.permute.xlu0 0
    %235 = vperm.xlu0 %234, %v233
    %v236 = vpop.permute.xlu0 %235
    %v238 = vmul.f32 %v236, %v101
    %v239 = vmul.f32 %v236, %v102
    %v240 = vmul.f32 %v236, %v103
    %v241 = vmul.f32 %v236, %v104
    %v242 = vmul.f32 %v236, %v105
    %v243 = vmul.f32 %v236, %v106
    %v244 = vmul.f32 %v236, %v107
    %v245 = vmul.f32 %v236, %v108
    %v246 = vmul.f32 %v236, %v109
    %v247 = vmul.f32 %v236, %v110
    %v248 = vmul.f32 %v236, %v111
    %v249 = vmul.f32 %v236, %v112
    %v250 = vmul.f32 %v236, %v113
    %v251 = vmul.f32 %v236, %v114
    %v252 = vmul.f32 %v236, %v115
    %v253 = vmul.f32 %v236, %v116
    %v254 = vadd.f32 %v216, %v238
    %v255 = vadd.f32 %v217, %v239
    %v256 = vadd.f32 %v218, %v240
    %v257 = vadd.f32 %v219, %v241
    %v258 = vadd.f32 %v220, %v242
    %v259 = vadd.f32 %v221, %v243
    %v260 = vadd.f32 %v222, %v244
    %v261 = vadd.f32 %v223, %v245
    %v262 = vadd.f32 %v224, %v246
    %v263 = vadd.f32 %v225, %v247
    %v264 = vadd.f32 %v226, %v248
    %v265 = vadd.f32 %v227, %v249
    %v266 = vadd.f32 %v228, %v250
    %v267 = vadd.f32 %v229, %v251
    %v268 = vadd.f32 %v230, %v252
    %v269 = vadd.f32 %v231, %v253
    %v270 = vld [vmem:[%s0 + $0x1] sm:$0x1]
    %v271 = vperm.slane %v270, 0
    %v272 = vmul.f32 %v271, %v68
    %v273 = vmul.f32 %v271, %v69
    %v274 = vmul.f32 %v271, %v70
    %v275 = vmul.f32 %v271, %v71
    %v276 = vmul.f32 %v271, %v72
    %v277 = vmul.f32 %v271, %v73
    %v278 = vmul.f32 %v271, %v74
    %v279 = vmul.f32 %v271, %v75
    %v280 = vmul.f32 %v271, %v76
    %v281 = vmul.f32 %v271, %v77
    %v282 = vmul.f32 %v271, %v78
    %v283 = vmul.f32 %v271, %v79
    %v284 = vmul.f32 %v271, %v80
    %v285 = vmul.f32 %v271, %v81
    %v286 = vmul.f32 %v271, %v82
    %v287 = vmul.f32 %v271, %v83
    %v288 = vadd.f32 %v272, %v84
    %v289 = vadd.f32 %v273, %v85
    %v290 = vadd.f32 %v274, %v86
    %v291 = vadd.f32 %v275, %v87
    %v292 = vadd.f32 %v276, %v88
    %v293 = vadd.f32 %v277, %v89
    %v294 = vadd.f32 %v278, %v90
    %v295 = vadd.f32 %v279, %v91
    %v296 = vadd.f32 %v280, %v92
    %v297 = vadd.f32 %v281, %v93
    %v298 = vadd.f32 %v282, %v94
    %v299 = vadd.f32 %v283, %v95
    %v300 = vadd.f32 %v284, %v96
    %v301 = vadd.f32 %v285, %v97
    %v302 = vadd.f32 %v286, %v98
    %v303 = vadd.f32 %v287, %v99
    %304 = vmatpush.msra.mxu0 %v269
    %305 = vmatpush.msra.mxu0 %v268
    %306 = vmatpush.msra.mxu0 %v267
    %307 = vmatpush.msra.mxu0 %v266
    %308 = vmatpush.msra.mxu0 %v265
    %309 = vmatpush.msra.mxu0 %v264
    %310 = vmatpush.msra.mxu0 %v263
    %311 = vmatpush.msra.mxu0 %v262
    %312 = vmatpush.msra.mxu0 %v261
    %313 = vmatpush.msra.mxu0 %v260
    %314 = vmatpush.msra.mxu0 %v259
    %315 = vmatpush.msra.mxu0 %v258
    %316 = vmatpush.msra.mxu0 %v257
    %317 = vmatpush.msra.mxu0 %v256
    %318 = vmatpush.msra.mxu0 %v255
    %319 = vmatpush.msra.mxu0 %v254
    %320 = vmatmul.f32.gmra.mxu0 %v52
    %v321 = vpop.f32.mrf.mxu0
    %v322 = vadd.f32 %v288, %v321
    %323 = vmatmul.f32.gmra.mxu0 %v53
    %v324 = vpop.f32.mrf.mxu0
    %v325 = vadd.f32 %v289, %v324
    %326 = vmatmul.f32.gmra.mxu0 %v54
    %v327 = vpop.f32.mrf.mxu0
    %v328 = vadd.f32 %v290, %v327
    %329 = vmatmul.f32.gmra.mxu0 %v55
    %v330 = vpop.f32.mrf.mxu0
    %v331 = vadd.f32 %v291, %v330
    %332 = vmatmul.f32.gmra.mxu0 %v56
    %v333 = vpop.f32.mrf.mxu0
    %v334 = vadd.f32 %v292, %v333
    %335 = vmatmul.f32.gmra.mxu0 %v57
    %v336 = vpop.f32.mrf.mxu0
    %v337 = vadd.f32 %v293, %v336
    %338 = vmatmul.f32.gmra.mxu0 %v58
    %v339 = vpop.f32.mrf.mxu0
    %v340 = vadd.f32 %v294, %v339
    %341 = vmatmul.f32.gmra.mxu0 %v59
    %v342 = vpop.f32.mrf.mxu0
    %v343 = vadd.f32 %v295, %v342
    %344 = vmatmul.f32.gmra.mxu0 %v60
    %v345 = vpop.f32.mrf.mxu0
    %v346 = vadd.f32 %v296, %v345
    %347 = vmatmul.f32.gmra.mxu0 %v61
    %v348 = vpop.f32.mrf.mxu0
    %v349 = vadd.f32 %v297, %v348
    %350 = vmatmul.f32.gmra.mxu0 %v62
    %v351 = vpop.f32.mrf.mxu0
    %v352 = vadd.f32 %v298, %v351
    %353 = vmatmul.f32.gmra.mxu0 %v63
    %v354 = vpop.f32.mrf.mxu0
    %v355 = vadd.f32 %v299, %v354
    %356 = vmatmul.f32.gmra.mxu0 %v64
    %v357 = vpop.f32.mrf.mxu0
    %v358 = vadd.f32 %v300, %v357
    %359 = vmatmul.f32.gmra.mxu0 %v65
    %v360 = vpop.f32.mrf.mxu0
    %v361 = vadd.f32 %v301, %v360
    %362 = vmatmul.f32.gmra.mxu0 %v66
    %v363 = vpop.f32.mrf.mxu0
    %v364 = vadd.f32 %v302, %v363
    %365 = vmatmul.f32.gmra.mxu0 %v67
    %v366 = vpop.f32.mrf.mxu0
    %v367 = vadd.f32 %v303, %v366
    %368 = vdwg.mxu0
    %v369 = vmax.f32 %v322, 0.0
    %v370 = vmax.f32 %v325, 0.0
    %v371 = vmax.f32 %v328, 0.0
    %v372 = vmax.f32 %v331, 0.0
    %v373 = vmax.f32 %v334, 0.0
    %v374 = vmax.f32 %v337, 0.0
    %v375 = vmax.f32 %v340, 0.0
    %v376 = vmax.f32 %v343, 0.0
    %v377 = vmax.f32 %v346, 0.0
    %v378 = vmax.f32 %v349, 0.0
    %v379 = vmax.f32 %v352, 0.0
    %v380 = vmax.f32 %v355, 0.0
    %v381 = vmax.f32 %v358, 0.0
    %v382 = vmax.f32 %v361, 0.0
    %v383 = vmax.f32 %v364, 0.0
    %v384 = vmax.f32 %v367, 0.0
    %v385 = vmul.f32 %v236, %v254
    %v386 = vmul.f32 %v236, %v255
    %v387 = vmul.f32 %v236, %v256
    %v388 = vmul.f32 %v236, %v257
    %v389 = vmul.f32 %v236, %v258
    %v390 = vmul.f32 %v236, %v259
    %v391 = vmul.f32 %v236, %v260
    %v392 = vmul.f32 %v236, %v261
    %v393 = vmul.f32 %v236, %v262
    %v394 = vmul.f32 %v236, %v263
    %v395 = vmul.f32 %v236, %v264
    %v396 = vmul.f32 %v236, %v265
    %v397 = vmul.f32 %v236, %v266
    %v398 = vmul.f32 %v236, %v267
    %v399 = vmul.f32 %v236, %v268
    %v400 = vmul.f32 %v236, %v269
    %v401 = vadd.f32 %v369, %v385
    %v402 = vadd.f32 %v370, %v386
    %v403 = vadd.f32 %v371, %v387
    %v404 = vadd.f32 %v372, %v388
    %v405 = vadd.f32 %v373, %v389
    %v406 = vadd.f32 %v374, %v390
    %v407 = vadd.f32 %v375, %v391
    %v408 = vadd.f32 %v376, %v392
    %v409 = vadd.f32 %v377, %v393
    %v410 = vadd.f32 %v378, %v394
    %v411 = vadd.f32 %v379, %v395
    %v412 = vadd.f32 %v380, %v396
    %v413 = vadd.f32 %v381, %v397
    %v414 = vadd.f32 %v382, %v398
    %v415 = vadd.f32 %v383, %v399
    %v416 = vadd.f32 %v384, %v400
    %v417 = vld [vmem:[%s0 + $0x2] sm:$0x1]
    %v418 = vperm.slane %v417, 0
    %v419 = vmul.f32 %v418, %v68
    %v420 = vmul.f32 %v418, %v69
    %v421 = vmul.f32 %v418, %v70
    %v422 = vmul.f32 %v418, %v71
    %v423 = vmul.f32 %v418, %v72
    %v424 = vmul.f32 %v418, %v73
    %v425 = vmul.f32 %v418, %v74
    %v426 = vmul.f32 %v418, %v75
    %v427 = vmul.f32 %v418, %v76
    %v428 = vmul.f32 %v418, %v77
    %v429 = vmul.f32 %v418, %v78
    %v430 = vmul.f32 %v418, %v79
    %v431 = vmul.f32 %v418, %v80
    %v432 = vmul.f32 %v418, %v81
    %v433 = vmul.f32 %v418, %v82
    %v434 = vmul.f32 %v418, %v83
    %v435 = vadd.f32 %v419, %v84
    %v436 = vadd.f32 %v420, %v85
    %v437 = vadd.f32 %v421, %v86
    %v438 = vadd.f32 %v422, %v87
    %v439 = vadd.f32 %v423, %v88
    %v440 = vadd.f32 %v424, %v89
    %v441 = vadd.f32 %v425, %v90
    %v442 = vadd.f32 %v426, %v91
    %v443 = vadd.f32 %v427, %v92
    %v444 = vadd.f32 %v428, %v93
    %v445 = vadd.f32 %v429, %v94
    %v446 = vadd.f32 %v430, %v95
    %v447 = vadd.f32 %v431, %v96
    %v448 = vadd.f32 %v432, %v97
    %v449 = vadd.f32 %v433, %v98
    %v450 = vadd.f32 %v434, %v99
    %451 = vmatpush.msra.mxu0 %v416
    %452 = vmatpush.msra.mxu0 %v415
    %453 = vmatpush.msra.mxu0 %v414
    %454 = vmatpush.msra.mxu0 %v413
    %455 = vmatpush.msra.mxu0 %v412
    %456 = vmatpush.msra.mxu0 %v411
    %457 = vmatpush.msra.mxu0 %v410
    %458 = vmatpush.msra.mxu0 %v409
    %459 = vmatpush.msra.mxu0 %v408
    %460 = vmatpush.msra.mxu0 %v407
    %461 = vmatpush.msra.mxu0 %v406
    %462 = vmatpush.msra.mxu0 %v405
    %463 = vmatpush.msra.mxu0 %v404
    %464 = vmatpush.msra.mxu0 %v403
    %465 = vmatpush.msra.mxu0 %v402
    %466 = vmatpush.msra.mxu0 %v401
    %467 = vmatmul.f32.gmra.mxu0 %v52
    %v468 = vpop.f32.mrf.mxu0
    %v469 = vadd.f32 %v435, %v468
    %470 = vmatmul.f32.gmra.mxu0 %v53
    %v471 = vpop.f32.mrf.mxu0
    %v472 = vadd.f32 %v436, %v471
    %473 = vmatmul.f32.gmra.mxu0 %v54
    %v474 = vpop.f32.mrf.mxu0
    %v475 = vadd.f32 %v437, %v474
    %476 = vmatmul.f32.gmra.mxu0 %v55
    %v477 = vpop.f32.mrf.mxu0
    %v478 = vadd.f32 %v438, %v477
    %479 = vmatmul.f32.gmra.mxu0 %v56
    %v480 = vpop.f32.mrf.mxu0
    %v481 = vadd.f32 %v439, %v480
    %482 = vmatmul.f32.gmra.mxu0 %v57
    %v483 = vpop.f32.mrf.mxu0
    %v484 = vadd.f32 %v440, %v483
    %485 = vmatmul.f32.gmra.mxu0 %v58
    %v486 = vpop.f32.mrf.mxu0
    %v487 = vadd.f32 %v441, %v486
    %488 = vmatmul.f32.gmra.mxu0 %v59
    %v489 = vpop.f32.mrf.mxu0
    %v490 = vadd.f32 %v442, %v489
    %491 = vmatmul.f32.gmra.mxu0 %v60
    %v492 = vpop.f32.mrf.mxu0
    %v493 = vadd.f32 %v443, %v492
    %494 = vmatmul.f32.gmra.mxu0 %v61
    %v495 = vpop.f32.mrf.mxu0
    %v496 = vadd.f32 %v444, %v495
    %497 = vmatmul.f32.gmra.mxu0 %v62
    %v498 = vpop.f32.mrf.mxu0
    %v499 = vadd.f32 %v445, %v498
    %500 = vmatmul.f32.gmra.mxu0 %v63
    %v501 = vpop.f32.mrf.mxu0
    %v502 = vadd.f32 %v446, %v501
    %503 = vmatmul.f32.gmra.mxu0 %v64
    %v504 = vpop.f32.mrf.mxu0
    %v505 = vadd.f32 %v447, %v504
    %506 = vmatmul.f32.gmra.mxu0 %v65
    %v507 = vpop.f32.mrf.mxu0
    %v508 = vadd.f32 %v448, %v507
    %509 = vmatmul.f32.gmra.mxu0 %v66
    %v510 = vpop.f32.mrf.mxu0
    %v511 = vadd.f32 %v449, %v510
    %512 = vmatmul.f32.gmra.mxu0 %v67
    %v513 = vpop.f32.mrf.mxu0
    %v514 = vadd.f32 %v450, %v513
    %515 = vdwg.mxu0
    %v516 = vmax.f32 %v469, 0.0
    %v517 = vmax.f32 %v472, 0.0
    %v518 = vmax.f32 %v475, 0.0
    %v519 = vmax.f32 %v478, 0.0
    %v520 = vmax.f32 %v481, 0.0
    %v521 = vmax.f32 %v484, 0.0
    %v522 = vmax.f32 %v487, 0.0
    %v523 = vmax.f32 %v490, 0.0
    %v524 = vmax.f32 %v493, 0.0
    %v525 = vmax.f32 %v496, 0.0
    %v526 = vmax.f32 %v499, 0.0
    %v527 = vmax.f32 %v502, 0.0
    %v528 = vmax.f32 %v505, 0.0
    %v529 = vmax.f32 %v508, 0.0
    %v530 = vmax.f32 %v511, 0.0
    %v531 = vmax.f32 %v514, 0.0
    %v532 = vmul.f32 %v236, %v401
    %v533 = vmul.f32 %v236, %v402
    %v534 = vmul.f32 %v236, %v403
    %v535 = vmul.f32 %v236, %v404
    %v536 = vmul.f32 %v236, %v405
    %v537 = vmul.f32 %v236, %v406
    %v538 = vmul.f32 %v236, %v407
    %v539 = vmul.f32 %v236, %v408
    %v540 = vmul.f32 %v236, %v409
    %v541 = vmul.f32 %v236, %v410
    %v542 = vmul.f32 %v236, %v411
    %v543 = vmul.f32 %v236, %v412
    %v544 = vmul.f32 %v236, %v413
    %v545 = vmul.f32 %v236, %v414
    %v546 = vmul.f32 %v236, %v415
    %v547 = vmul.f32 %v236, %v416
    %v548 = vadd.f32 %v516, %v532
    %v549 = vadd.f32 %v517, %v533
    %v550 = vadd.f32 %v518, %v534
    %v551 = vadd.f32 %v519, %v535
    %v552 = vadd.f32 %v520, %v536
    %v553 = vadd.f32 %v521, %v537
    %v554 = vadd.f32 %v522, %v538
    %v555 = vadd.f32 %v523, %v539
    %v556 = vadd.f32 %v524, %v540
    %v557 = vadd.f32 %v525, %v541
    %v558 = vadd.f32 %v526, %v542
    %v559 = vadd.f32 %v527, %v543
    %v560 = vadd.f32 %v528, %v544
    %v561 = vadd.f32 %v529, %v545
    %v562 = vadd.f32 %v530, %v546
    %v563 = vadd.f32 %v531, %v547
    %v564 = vld [vmem:[%s0 + $0x3] sm:$0x1]
    %v565 = vperm.slane %v564, 0
    %v566 = vmul.f32 %v565, %v68
    %v567 = vmul.f32 %v565, %v69
    %v568 = vmul.f32 %v565, %v70
    %v569 = vmul.f32 %v565, %v71
    %v570 = vmul.f32 %v565, %v72
    %v571 = vmul.f32 %v565, %v73
    %v572 = vmul.f32 %v565, %v74
    %v573 = vmul.f32 %v565, %v75
    %v574 = vmul.f32 %v565, %v76
    %v575 = vmul.f32 %v565, %v77
    %v576 = vmul.f32 %v565, %v78
    %v577 = vmul.f32 %v565, %v79
    %v578 = vmul.f32 %v565, %v80
    %v579 = vmul.f32 %v565, %v81
    %v580 = vmul.f32 %v565, %v82
    %v581 = vmul.f32 %v565, %v83
    %v582 = vadd.f32 %v566, %v84
    %v583 = vadd.f32 %v567, %v85
    %v584 = vadd.f32 %v568, %v86
    %v585 = vadd.f32 %v569, %v87
    %v586 = vadd.f32 %v570, %v88
    %v587 = vadd.f32 %v571, %v89
    %v588 = vadd.f32 %v572, %v90
    %v589 = vadd.f32 %v573, %v91
    %v590 = vadd.f32 %v574, %v92
    %v591 = vadd.f32 %v575, %v93
    %v592 = vadd.f32 %v576, %v94
    %v593 = vadd.f32 %v577, %v95
    %v594 = vadd.f32 %v578, %v96
    %v595 = vadd.f32 %v579, %v97
    %v596 = vadd.f32 %v580, %v98
    %v597 = vadd.f32 %v581, %v99
    %598 = vmatpush.msra.mxu0 %v563
    %599 = vmatpush.msra.mxu0 %v562
    %600 = vmatpush.msra.mxu0 %v561
    %601 = vmatpush.msra.mxu0 %v560
    %602 = vmatpush.msra.mxu0 %v559
    %603 = vmatpush.msra.mxu0 %v558
    %604 = vmatpush.msra.mxu0 %v557
    %605 = vmatpush.msra.mxu0 %v556
    %606 = vmatpush.msra.mxu0 %v555
    %607 = vmatpush.msra.mxu0 %v554
    %608 = vmatpush.msra.mxu0 %v553
    %609 = vmatpush.msra.mxu0 %v552
    %610 = vmatpush.msra.mxu0 %v551
    %611 = vmatpush.msra.mxu0 %v550
    %612 = vmatpush.msra.mxu0 %v549
    %613 = vmatpush.msra.mxu0 %v548
    %614 = vmatmul.f32.gmra.mxu0 %v52
    %v615 = vpop.f32.mrf.mxu0
    %v616 = vadd.f32 %v582, %v615
    %617 = vmatmul.f32.gmra.mxu0 %v53
    %v618 = vpop.f32.mrf.mxu0
    %v619 = vadd.f32 %v583, %v618
    %620 = vmatmul.f32.gmra.mxu0 %v54
    %v621 = vpop.f32.mrf.mxu0
    %v622 = vadd.f32 %v584, %v621
    %623 = vmatmul.f32.gmra.mxu0 %v55
    %v624 = vpop.f32.mrf.mxu0
    %v625 = vadd.f32 %v585, %v624
    %626 = vmatmul.f32.gmra.mxu0 %v56
    %v627 = vpop.f32.mrf.mxu0
    %v628 = vadd.f32 %v586, %v627
    %629 = vmatmul.f32.gmra.mxu0 %v57
    %v630 = vpop.f32.mrf.mxu0
    %v631 = vadd.f32 %v587, %v630
    %632 = vmatmul.f32.gmra.mxu0 %v58
    %v633 = vpop.f32.mrf.mxu0
    %v634 = vadd.f32 %v588, %v633
    %635 = vmatmul.f32.gmra.mxu0 %v59
    %v636 = vpop.f32.mrf.mxu0
    %v637 = vadd.f32 %v589, %v636
    %638 = vmatmul.f32.gmra.mxu0 %v60
    %v639 = vpop.f32.mrf.mxu0
    %v640 = vadd.f32 %v590, %v639
    %641 = vmatmul.f32.gmra.mxu0 %v61
    %v642 = vpop.f32.mrf.mxu0
    %v643 = vadd.f32 %v591, %v642
    %644 = vmatmul.f32.gmra.mxu0 %v62
    %v645 = vpop.f32.mrf.mxu0
    %v646 = vadd.f32 %v592, %v645
    %647 = vmatmul.f32.gmra.mxu0 %v63
    %v648 = vpop.f32.mrf.mxu0
    %v649 = vadd.f32 %v593, %v648
    %650 = vmatmul.f32.gmra.mxu0 %v64
    %v651 = vpop.f32.mrf.mxu0
    %v652 = vadd.f32 %v594, %v651
    %653 = vmatmul.f32.gmra.mxu0 %v65
    %v654 = vpop.f32.mrf.mxu0
    %v655 = vadd.f32 %v595, %v654
    %656 = vmatmul.f32.gmra.mxu0 %v66
    %v657 = vpop.f32.mrf.mxu0
    %v658 = vadd.f32 %v596, %v657
    %659 = vmatmul.f32.gmra.mxu0 %v67
    %v660 = vpop.f32.mrf.mxu0
    %v661 = vadd.f32 %v597, %v660
    %662 = vdwg.mxu0
    %v663 = vmax.f32 %v616, 0.0
    %v664 = vmax.f32 %v619, 0.0
    %v665 = vmax.f32 %v622, 0.0
    %v666 = vmax.f32 %v625, 0.0
    %v667 = vmax.f32 %v628, 0.0
    %v668 = vmax.f32 %v631, 0.0
    %v669 = vmax.f32 %v634, 0.0
    %v670 = vmax.f32 %v637, 0.0
    %v671 = vmax.f32 %v640, 0.0
    %v672 = vmax.f32 %v643, 0.0
    %v673 = vmax.f32 %v646, 0.0
    %v674 = vmax.f32 %v649, 0.0
    %v675 = vmax.f32 %v652, 0.0
    %v676 = vmax.f32 %v655, 0.0
    %v677 = vmax.f32 %v658, 0.0
    %v678 = vmax.f32 %v661, 0.0
    %v679 = vmul.f32 %v236, %v548
    %v680 = vmul.f32 %v236, %v549
    %v681 = vmul.f32 %v236, %v550
    %v682 = vmul.f32 %v236, %v551
    %v683 = vmul.f32 %v236, %v552
    %v684 = vmul.f32 %v236, %v553
    %v685 = vmul.f32 %v236, %v554
    %v686 = vmul.f32 %v236, %v555
    %v687 = vmul.f32 %v236, %v556
    %v688 = vmul.f32 %v236, %v557
    %v689 = vmul.f32 %v236, %v558
    %v690 = vmul.f32 %v236, %v559
    %v691 = vmul.f32 %v236, %v560
    %v692 = vmul.f32 %v236, %v561
    %v693 = vmul.f32 %v236, %v562
    %v694 = vmul.f32 %v236, %v563
    %v695 = vadd.f32 %v663, %v679
    %v696 = vadd.f32 %v664, %v680
    %v697 = vadd.f32 %v665, %v681
    %v698 = vadd.f32 %v666, %v682
    %v699 = vadd.f32 %v667, %v683
    %v700 = vadd.f32 %v668, %v684
    %v701 = vadd.f32 %v669, %v685
    %v702 = vadd.f32 %v670, %v686
    %v703 = vadd.f32 %v671, %v687
    %v704 = vadd.f32 %v672, %v688
    %v705 = vadd.f32 %v673, %v689
    %v706 = vadd.f32 %v674, %v690
    %v707 = vadd.f32 %v675, %v691
    %v708 = vadd.f32 %v676, %v692
    %v709 = vadd.f32 %v677, %v693
    %v710 = vadd.f32 %v678, %v694
    %v711 = vld [vmem:[%s0 + $0x4] sm:$0x1]
    %v712 = vperm.slane %v711, 0
    %v713 = vmul.f32 %v712, %v68
    %v714 = vmul.f32 %v712, %v69
    %v715 = vmul.f32 %v712, %v70
    %v716 = vmul.f32 %v712, %v71
    %v717 = vmul.f32 %v712, %v72
    %v718 = vmul.f32 %v712, %v73
    %v719 = vmul.f32 %v712, %v74
    %v720 = vmul.f32 %v712, %v75
    %v721 = vmul.f32 %v712, %v76
    %v722 = vmul.f32 %v712, %v77
    %v723 = vmul.f32 %v712, %v78
    %v724 = vmul.f32 %v712, %v79
    %v725 = vmul.f32 %v712, %v80
    %v726 = vmul.f32 %v712, %v81
    %v727 = vmul.f32 %v712, %v82
    %v728 = vmul.f32 %v712, %v83
    %v729 = vadd.f32 %v713, %v84
    %v730 = vadd.f32 %v714, %v85
    %v731 = vadd.f32 %v715, %v86
    %v732 = vadd.f32 %v716, %v87
    %v733 = vadd.f32 %v717, %v88
    %v734 = vadd.f32 %v718, %v89
    %v735 = vadd.f32 %v719, %v90
    %v736 = vadd.f32 %v720, %v91
    %v737 = vadd.f32 %v721, %v92
    %v738 = vadd.f32 %v722, %v93
    %v739 = vadd.f32 %v723, %v94
    %v740 = vadd.f32 %v724, %v95
    %v741 = vadd.f32 %v725, %v96
    %v742 = vadd.f32 %v726, %v97
    %v743 = vadd.f32 %v727, %v98
    %v744 = vadd.f32 %v728, %v99
    %745 = vmatpush.msra.mxu0 %v710
    %746 = vmatpush.msra.mxu0 %v709
    %747 = vmatpush.msra.mxu0 %v708
    %748 = vmatpush.msra.mxu0 %v707
    %749 = vmatpush.msra.mxu0 %v706
    %750 = vmatpush.msra.mxu0 %v705
    %751 = vmatpush.msra.mxu0 %v704
    %752 = vmatpush.msra.mxu0 %v703
    %753 = vmatpush.msra.mxu0 %v702
    %754 = vmatpush.msra.mxu0 %v701
    %755 = vmatpush.msra.mxu0 %v700
    %756 = vmatpush.msra.mxu0 %v699
    %757 = vmatpush.msra.mxu0 %v698
    %758 = vmatpush.msra.mxu0 %v697
    %759 = vmatpush.msra.mxu0 %v696
    %760 = vmatpush.msra.mxu0 %v695
    %761 = vmatmul.f32.gmra.mxu0 %v52
    %v762 = vpop.f32.mrf.mxu0
    %v763 = vadd.f32 %v729, %v762
    %764 = vmatmul.f32.gmra.mxu0 %v53
    %v765 = vpop.f32.mrf.mxu0
    %v766 = vadd.f32 %v730, %v765
    %767 = vmatmul.f32.gmra.mxu0 %v54
    %v768 = vpop.f32.mrf.mxu0
    %v769 = vadd.f32 %v731, %v768
    %770 = vmatmul.f32.gmra.mxu0 %v55
    %v771 = vpop.f32.mrf.mxu0
    %v772 = vadd.f32 %v732, %v771
    %773 = vmatmul.f32.gmra.mxu0 %v56
    %v774 = vpop.f32.mrf.mxu0
    %v775 = vadd.f32 %v733, %v774
    %776 = vmatmul.f32.gmra.mxu0 %v57
    %v777 = vpop.f32.mrf.mxu0
    %v778 = vadd.f32 %v734, %v777
    %779 = vmatmul.f32.gmra.mxu0 %v58
    %v780 = vpop.f32.mrf.mxu0
    %v781 = vadd.f32 %v735, %v780
    %782 = vmatmul.f32.gmra.mxu0 %v59
    %v783 = vpop.f32.mrf.mxu0
    %v784 = vadd.f32 %v736, %v783
    %785 = vmatmul.f32.gmra.mxu0 %v60
    %v786 = vpop.f32.mrf.mxu0
    %v787 = vadd.f32 %v737, %v786
    %788 = vmatmul.f32.gmra.mxu0 %v61
    %v789 = vpop.f32.mrf.mxu0
    %v790 = vadd.f32 %v738, %v789
    %791 = vmatmul.f32.gmra.mxu0 %v62
    %v792 = vpop.f32.mrf.mxu0
    %v793 = vadd.f32 %v739, %v792
    %794 = vmatmul.f32.gmra.mxu0 %v63
    %v795 = vpop.f32.mrf.mxu0
    %v796 = vadd.f32 %v740, %v795
    %797 = vmatmul.f32.gmra.mxu0 %v64
    %v798 = vpop.f32.mrf.mxu0
    %v799 = vadd.f32 %v741, %v798
    %800 = vmatmul.f32.gmra.mxu0 %v65
    %v801 = vpop.f32.mrf.mxu0
    %v802 = vadd.f32 %v742, %v801
    %803 = vmatmul.f32.gmra.mxu0 %v66
    %v804 = vpop.f32.mrf.mxu0
    %v805 = vadd.f32 %v743, %v804
    %806 = vmatmul.f32.gmra.mxu0 %v67
    %v807 = vpop.f32.mrf.mxu0
    %v808 = vadd.f32 %v744, %v807
    %809 = vdwg.mxu0
    %v810 = vmax.f32 %v763, 0.0
    %v811 = vmax.f32 %v766, 0.0
    %v812 = vmax.f32 %v769, 0.0
    %v813 = vmax.f32 %v772, 0.0
    %v814 = vmax.f32 %v775, 0.0
    %v815 = vmax.f32 %v778, 0.0
    %v816 = vmax.f32 %v781, 0.0
    %v817 = vmax.f32 %v784, 0.0
    %v818 = vmax.f32 %v787, 0.0
    %v819 = vmax.f32 %v790, 0.0
    %v820 = vmax.f32 %v793, 0.0
    %v821 = vmax.f32 %v796, 0.0
    %v822 = vmax.f32 %v799, 0.0
    %v823 = vmax.f32 %v802, 0.0
    %v824 = vmax.f32 %v805, 0.0
    %v825 = vmax.f32 %v808, 0.0
    %v826 = vmul.f32 %v236, %v695
    %v827 = vmul.f32 %v236, %v696
    %v828 = vmul.f32 %v236, %v697
    %v829 = vmul.f32 %v236, %v698
    %v830 = vmul.f32 %v236, %v699
    %v831 = vmul.f32 %v236, %v700
    %v832 = vmul.f32 %v236, %v701
    %v833 = vmul.f32 %v236, %v702
    %v834 = vmul.f32 %v236, %v703
    %v835 = vmul.f32 %v236, %v704
    %v836 = vmul.f32 %v236, %v705
    %v837 = vmul.f32 %v236, %v706
    %v838 = vmul.f32 %v236, %v707
    %v839 = vmul.f32 %v236, %v708
    %v840 = vmul.f32 %v236, %v709
    %v841 = vmul.f32 %v236, %v710
    %v842 = vadd.f32 %v810, %v826
    %v843 = vadd.f32 %v811, %v827
    %v844 = vadd.f32 %v812, %v828
    %v845 = vadd.f32 %v813, %v829
    %v846 = vadd.f32 %v814, %v830
    %v847 = vadd.f32 %v815, %v831
    %v848 = vadd.f32 %v816, %v832
    %v849 = vadd.f32 %v817, %v833
    %v850 = vadd.f32 %v818, %v834
    %v851 = vadd.f32 %v819, %v835
    %v852 = vadd.f32 %v820, %v836
    %v853 = vadd.f32 %v821, %v837
    %v854 = vadd.f32 %v822, %v838
    %v855 = vadd.f32 %v823, %v839
    %v856 = vadd.f32 %v824, %v840
    %v857 = vadd.f32 %v825, %v841
    %v858 = vld [vmem:[%s0 + $0x5] sm:$0x1]
    %v859 = vperm.slane %v858, 0
    %v860 = vmul.f32 %v859, %v68
    %v861 = vmul.f32 %v859, %v69
    %v862 = vmul.f32 %v859, %v70
    %v863 = vmul.f32 %v859, %v71
    %v864 = vmul.f32 %v859, %v72
    %v865 = vmul.f32 %v859, %v73
    %v866 = vmul.f32 %v859, %v74
    %v867 = vmul.f32 %v859, %v75
    %v868 = vmul.f32 %v859, %v76
    %v869 = vmul.f32 %v859, %v77
    %v870 = vmul.f32 %v859, %v78
    %v871 = vmul.f32 %v859, %v79
    %v872 = vmul.f32 %v859, %v80
    %v873 = vmul.f32 %v859, %v81
    %v874 = vmul.f32 %v859, %v82
    %v875 = vmul.f32 %v859, %v83
    %v876 = vadd.f32 %v860, %v84
    %v877 = vadd.f32 %v861, %v85
    %v878 = vadd.f32 %v862, %v86
    %v879 = vadd.f32 %v863, %v87
    %v880 = vadd.f32 %v864, %v88
    %v881 = vadd.f32 %v865, %v89
    %v882 = vadd.f32 %v866, %v90
    %v883 = vadd.f32 %v867, %v91
    %v884 = vadd.f32 %v868, %v92
    %v885 = vadd.f32 %v869, %v93
    %v886 = vadd.f32 %v870, %v94
    %v887 = vadd.f32 %v871, %v95
    %v888 = vadd.f32 %v872, %v96
    %v889 = vadd.f32 %v873, %v97
    %v890 = vadd.f32 %v874, %v98
    %v891 = vadd.f32 %v875, %v99
    %892 = vmatpush.msra.mxu0 %v857
    %893 = vmatpush.msra.mxu0 %v856
    %894 = vmatpush.msra.mxu0 %v855
    %895 = vmatpush.msra.mxu0 %v854
    %896 = vmatpush.msra.mxu0 %v853
    %897 = vmatpush.msra.mxu0 %v852
    %898 = vmatpush.msra.mxu0 %v851
    %899 = vmatpush.msra.mxu0 %v850
    %900 = vmatpush.msra.mxu0 %v849
    %901 = vmatpush.msra.mxu0 %v848
    %902 = vmatpush.msra.mxu0 %v847
    %903 = vmatpush.msra.mxu0 %v846
    %904 = vmatpush.msra.mxu0 %v845
    %905 = vmatpush.msra.mxu0 %v844
    %906 = vmatpush.msra.mxu0 %v843
    %907 = vmatpush.msra.mxu0 %v842
    %908 = vmatmul.f32.gmra.mxu0 %v52
    %v909 = vpop.f32.mrf.mxu0
    %v910 = vadd.f32 %v876, %v909
    %911 = vmatmul.f32.gmra.mxu0 %v53
    %v912 = vpop.f32.mrf.mxu0
    %v913 = vadd.f32 %v877, %v912
    %914 = vmatmul.f32.gmra.mxu0 %v54
    %v915 = vpop.f32.mrf.mxu0
    %v916 = vadd.f32 %v878, %v915
    %917 = vmatmul.f32.gmra.mxu0 %v55
    %v918 = vpop.f32.mrf.mxu0
    %v919 = vadd.f32 %v879, %v918
    %920 = vmatmul.f32.gmra.mxu0 %v56
    %v921 = vpop.f32.mrf.mxu0
    %v922 = vadd.f32 %v880, %v921
    %923 = vmatmul.f32.gmra.mxu0 %v57
    %v924 = vpop.f32.mrf.mxu0
    %v925 = vadd.f32 %v881, %v924
    %926 = vmatmul.f32.gmra.mxu0 %v58
    %v927 = vpop.f32.mrf.mxu0
    %v928 = vadd.f32 %v882, %v927
    %929 = vmatmul.f32.gmra.mxu0 %v59
    %v930 = vpop.f32.mrf.mxu0
    %v931 = vadd.f32 %v883, %v930
    %932 = vmatmul.f32.gmra.mxu0 %v60
    %v933 = vpop.f32.mrf.mxu0
    %v934 = vadd.f32 %v884, %v933
    %935 = vmatmul.f32.gmra.mxu0 %v61
    %v936 = vpop.f32.mrf.mxu0
    %v937 = vadd.f32 %v885, %v936
    %938 = vmatmul.f32.gmra.mxu0 %v62
    %v939 = vpop.f32.mrf.mxu0
    %v940 = vadd.f32 %v886, %v939
    %941 = vmatmul.f32.gmra.mxu0 %v63
    %v942 = vpop.f32.mrf.mxu0
    %v943 = vadd.f32 %v887, %v942
    %944 = vmatmul.f32.gmra.mxu0 %v64
    %v945 = vpop.f32.mrf.mxu0
    %v946 = vadd.f32 %v888, %v945
    %947 = vmatmul.f32.gmra.mxu0 %v65
    %v948 = vpop.f32.mrf.mxu0
    %v949 = vadd.f32 %v889, %v948
    %950 = vmatmul.f32.gmra.mxu0 %v66
    %v951 = vpop.f32.mrf.mxu0
    %v952 = vadd.f32 %v890, %v951
    %953 = vmatmul.f32.gmra.mxu0 %v67
    %v954 = vpop.f32.mrf.mxu0
    %v955 = vadd.f32 %v891, %v954
    %956 = vdwg.mxu0
    %v957 = vmax.f32 %v910, 0.0
    %v958 = vmax.f32 %v913, 0.0
    %v959 = vmax.f32 %v916, 0.0
    %v960 = vmax.f32 %v919, 0.0
    %v961 = vmax.f32 %v922, 0.0
    %v962 = vmax.f32 %v925, 0.0
    %v963 = vmax.f32 %v928, 0.0
    %v964 = vmax.f32 %v931, 0.0
    %v965 = vmax.f32 %v934, 0.0
    %v966 = vmax.f32 %v937, 0.0
    %v967 = vmax.f32 %v940, 0.0
    %v968 = vmax.f32 %v943, 0.0
    %v969 = vmax.f32 %v946, 0.0
    %v970 = vmax.f32 %v949, 0.0
    %v971 = vmax.f32 %v952, 0.0
    %v972 = vmax.f32 %v955, 0.0
    %v973 = vmul.f32 %v236, %v842
    %v974 = vmul.f32 %v236, %v843
    %v975 = vmul.f32 %v236, %v844
    %v976 = vmul.f32 %v236, %v845
    %v977 = vmul.f32 %v236, %v846
    %v978 = vmul.f32 %v236, %v847
    %v979 = vmul.f32 %v236, %v848
    %v980 = vmul.f32 %v236, %v849
    %v981 = vmul.f32 %v236, %v850
    %v982 = vmul.f32 %v236, %v851
    %v983 = vmul.f32 %v236, %v852
    %v984 = vmul.f32 %v236, %v853
    %v985 = vmul.f32 %v236, %v854
    %v986 = vmul.f32 %v236, %v855
    %v987 = vmul.f32 %v236, %v856
    %v988 = vmul.f32 %v236, %v857
    %v989 = vadd.f32 %v957, %v973
    %v990 = vadd.f32 %v958, %v974
    %v991 = vadd.f32 %v959, %v975
    %v992 = vadd.f32 %v960, %v976
    %v993 = vadd.f32 %v961, %v977
    %v994 = vadd.f32 %v962, %v978
    %v995 = vadd.f32 %v963, %v979
    %v996 = vadd.f32 %v964, %v980
    %v997 = vadd.f32 %v965, %v981
    %v998 = vadd.f32 %v966, %v982
    %v999 = vadd.f32 %v967, %v983
    %v1000 = vadd.f32 %v968, %v984
    %v1001 = vadd.f32 %v969, %v985
    %v1002 = vadd.f32 %v970, %v986
    %v1003 = vadd.f32 %v971, %v987
    %v1004 = vadd.f32 %v972, %v988
    %v1005 = vld [vmem:[%s0 + $0x6] sm:$0x1]
    %v1006 = vperm.slane %v1005, 0
    %v1007 = vmul.f32 %v1006, %v68
    %v1008 = vmul.f32 %v1006, %v69
    %v1009 = vmul.f32 %v1006, %v70
    %v1010 = vmul.f32 %v1006, %v71
    %v1011 = vmul.f32 %v1006, %v72
    %v1012 = vmul.f32 %v1006, %v73
    %v1013 = vmul.f32 %v1006, %v74
    %v1014 = vmul.f32 %v1006, %v75
    %v1015 = vmul.f32 %v1006, %v76
    %v1016 = vmul.f32 %v1006, %v77
    %v1017 = vmul.f32 %v1006, %v78
    %v1018 = vmul.f32 %v1006, %v79
    %v1019 = vmul.f32 %v1006, %v80
    %v1020 = vmul.f32 %v1006, %v81
    %v1021 = vmul.f32 %v1006, %v82
    %v1022 = vmul.f32 %v1006, %v83
    %v1023 = vadd.f32 %v1007, %v84
    %v1024 = vadd.f32 %v1008, %v85
    %v1025 = vadd.f32 %v1009, %v86
    %v1026 = vadd.f32 %v1010, %v87
    %v1027 = vadd.f32 %v1011, %v88
    %v1028 = vadd.f32 %v1012, %v89
    %v1029 = vadd.f32 %v1013, %v90
    %v1030 = vadd.f32 %v1014, %v91
    %v1031 = vadd.f32 %v1015, %v92
    %v1032 = vadd.f32 %v1016, %v93
    %v1033 = vadd.f32 %v1017, %v94
    %v1034 = vadd.f32 %v1018, %v95
    %v1035 = vadd.f32 %v1019, %v96
    %v1036 = vadd.f32 %v1020, %v97
    %v1037 = vadd.f32 %v1021, %v98
    %v1038 = vadd.f32 %v1022, %v99
    %1039 = vmatpush.msra.mxu0 %v1004
    %1040 = vmatpush.msra.mxu0 %v1003
    %1041 = vmatpush.msra.mxu0 %v1002
    %1042 = vmatpush.msra.mxu0 %v1001
    %1043 = vmatpush.msra.mxu0 %v1000
    %1044 = vmatpush.msra.mxu0 %v999
    %1045 = vmatpush.msra.mxu0 %v998
    %1046 = vmatpush.msra.mxu0 %v997
    %1047 = vmatpush.msra.mxu0 %v996
    %1048 = vmatpush.msra.mxu0 %v995
    %1049 = vmatpush.msra.mxu0 %v994
    %1050 = vmatpush.msra.mxu0 %v993
    %1051 = vmatpush.msra.mxu0 %v992
    %1052 = vmatpush.msra.mxu0 %v991
    %1053 = vmatpush.msra.mxu0 %v990
    %1054 = vmatpush.msra.mxu0 %v989
    %1055 = vmatmul.f32.gmra.mxu0 %v52
    %v1056 = vpop.f32.mrf.mxu0
    %v1057 = vadd.f32 %v1023, %v1056
    %1058 = vmatmul.f32.gmra.mxu0 %v53
    %v1059 = vpop.f32.mrf.mxu0
    %v1060 = vadd.f32 %v1024, %v1059
    %1061 = vmatmul.f32.gmra.mxu0 %v54
    %v1062 = vpop.f32.mrf.mxu0
    %v1063 = vadd.f32 %v1025, %v1062
    %1064 = vmatmul.f32.gmra.mxu0 %v55
    %v1065 = vpop.f32.mrf.mxu0
    %v1066 = vadd.f32 %v1026, %v1065
    %1067 = vmatmul.f32.gmra.mxu0 %v56
    %v1068 = vpop.f32.mrf.mxu0
    %v1069 = vadd.f32 %v1027, %v1068
    %1070 = vmatmul.f32.gmra.mxu0 %v57
    %v1071 = vpop.f32.mrf.mxu0
    %v1072 = vadd.f32 %v1028, %v1071
    %1073 = vmatmul.f32.gmra.mxu0 %v58
    %v1074 = vpop.f32.mrf.mxu0
    %v1075 = vadd.f32 %v1029, %v1074
    %1076 = vmatmul.f32.gmra.mxu0 %v59
    %v1077 = vpop.f32.mrf.mxu0
    %v1078 = vadd.f32 %v1030, %v1077
    %1079 = vmatmul.f32.gmra.mxu0 %v60
    %v1080 = vpop.f32.mrf.mxu0
    %v1081 = vadd.f32 %v1031, %v1080
    %1082 = vmatmul.f32.gmra.mxu0 %v61
    %v1083 = vpop.f32.mrf.mxu0
    %v1084 = vadd.f32 %v1032, %v1083
    %1085 = vmatmul.f32.gmra.mxu0 %v62
    %v1086 = vpop.f32.mrf.mxu0
    %v1087 = vadd.f32 %v1033, %v1086
    %1088 = vmatmul.f32.gmra.mxu0 %v63
    %v1089 = vpop.f32.mrf.mxu0
    %v1090 = vadd.f32 %v1034, %v1089
    %1091 = vmatmul.f32.gmra.mxu0 %v64
    %v1092 = vpop.f32.mrf.mxu0
    %v1093 = vadd.f32 %v1035, %v1092
    %1094 = vmatmul.f32.gmra.mxu0 %v65
    %v1095 = vpop.f32.mrf.mxu0
    %v1096 = vadd.f32 %v1036, %v1095
    %1097 = vmatmul.f32.gmra.mxu0 %v66
    %v1098 = vpop.f32.mrf.mxu0
    %v1099 = vadd.f32 %v1037, %v1098
    %1100 = vmatmul.f32.gmra.mxu0 %v67
    %v1101 = vpop.f32.mrf.mxu0
    %v1102 = vadd.f32 %v1038, %v1101
    %1103 = vdwg.mxu0
    %v1104 = vmax.f32 %v1057, 0.0
    %v1105 = vmax.f32 %v1060, 0.0
    %v1106 = vmax.f32 %v1063, 0.0
    %v1107 = vmax.f32 %v1066, 0.0
    %v1108 = vmax.f32 %v1069, 0.0
    %v1109 = vmax.f32 %v1072, 0.0
    %v1110 = vmax.f32 %v1075, 0.0
    %v1111 = vmax.f32 %v1078, 0.0
    %v1112 = vmax.f32 %v1081, 0.0
    %v1113 = vmax.f32 %v1084, 0.0
    %v1114 = vmax.f32 %v1087, 0.0
    %v1115 = vmax.f32 %v1090, 0.0
    %v1116 = vmax.f32 %v1093, 0.0
    %v1117 = vmax.f32 %v1096, 0.0
    %v1118 = vmax.f32 %v1099, 0.0
    %v1119 = vmax.f32 %v1102, 0.0
    %v1120 = vmul.f32 %v236, %v989
    %v1121 = vmul.f32 %v236, %v990
    %v1122 = vmul.f32 %v236, %v991
    %v1123 = vmul.f32 %v236, %v992
    %v1124 = vmul.f32 %v236, %v993
    %v1125 = vmul.f32 %v236, %v994
    %v1126 = vmul.f32 %v236, %v995
    %v1127 = vmul.f32 %v236, %v996
    %v1128 = vmul.f32 %v236, %v997
    %v1129 = vmul.f32 %v236, %v998
    %v1130 = vmul.f32 %v236, %v999
    %v1131 = vmul.f32 %v236, %v1000
    %v1132 = vmul.f32 %v236, %v1001
    %v1133 = vmul.f32 %v236, %v1002
    %v1134 = vmul.f32 %v236, %v1003
    %v1135 = vmul.f32 %v236, %v1004
    %v1136 = vadd.f32 %v1104, %v1120
    %v1137 = vadd.f32 %v1105, %v1121
    %v1138 = vadd.f32 %v1106, %v1122
    %v1139 = vadd.f32 %v1107, %v1123
    %v1140 = vadd.f32 %v1108, %v1124
    %v1141 = vadd.f32 %v1109, %v1125
    %v1142 = vadd.f32 %v1110, %v1126
    %v1143 = vadd.f32 %v1111, %v1127
    %v1144 = vadd.f32 %v1112, %v1128
    %v1145 = vadd.f32 %v1113, %v1129
    %v1146 = vadd.f32 %v1114, %v1130
    %v1147 = vadd.f32 %v1115, %v1131
    %v1148 = vadd.f32 %v1116, %v1132
    %v1149 = vadd.f32 %v1117, %v1133
    %v1150 = vadd.f32 %v1118, %v1134
    %v1151 = vadd.f32 %v1119, %v1135
    %v1152 = vld [vmem:[%s0 + $0x7] sm:$0x1]
    %v1153 = vperm.slane %v1152, 0
    %v1154 = vmul.f32 %v1153, %v68
    %v1155 = vmul.f32 %v1153, %v69
    %v1156 = vmul.f32 %v1153, %v70
    %v1157 = vmul.f32 %v1153, %v71
    %v1158 = vmul.f32 %v1153, %v72
    %v1159 = vmul.f32 %v1153, %v73
    %v1160 = vmul.f32 %v1153, %v74
    %v1161 = vmul.f32 %v1153, %v75
    %v1162 = vmul.f32 %v1153, %v76
    %v1163 = vmul.f32 %v1153, %v77
    %v1164 = vmul.f32 %v1153, %v78
    %v1165 = vmul.f32 %v1153, %v79
    %v1166 = vmul.f32 %v1153, %v80
    %v1167 = vmul.f32 %v1153, %v81
    %v1168 = vmul.f32 %v1153, %v82
    %v1169 = vmul.f32 %v1153, %v83
    %v1170 = vadd.f32 %v1154, %v84
    %v1171 = vadd.f32 %v1155, %v85
    %v1172 = vadd.f32 %v1156, %v86
    %v1173 = vadd.f32 %v1157, %v87
    %v1174 = vadd.f32 %v1158, %v88
    %v1175 = vadd.f32 %v1159, %v89
    %v1176 = vadd.f32 %v1160, %v90
    %v1177 = vadd.f32 %v1161, %v91
    %v1178 = vadd.f32 %v1162, %v92
    %v1179 = vadd.f32 %v1163, %v93
    %v1180 = vadd.f32 %v1164, %v94
    %v1181 = vadd.f32 %v1165, %v95
    %v1182 = vadd.f32 %v1166, %v96
    %v1183 = vadd.f32 %v1167, %v97
    %v1184 = vadd.f32 %v1168, %v98
    %v1185 = vadd.f32 %v1169, %v99
    %1186 = vmatpush.msra.mxu0 %v1151
    %1187 = vmatpush.msra.mxu0 %v1150
    %1188 = vmatpush.msra.mxu0 %v1149
    %1189 = vmatpush.msra.mxu0 %v1148
    %1190 = vmatpush.msra.mxu0 %v1147
    %1191 = vmatpush.msra.mxu0 %v1146
    %1192 = vmatpush.msra.mxu0 %v1145
    %1193 = vmatpush.msra.mxu0 %v1144
    %1194 = vmatpush.msra.mxu0 %v1143
    %1195 = vmatpush.msra.mxu0 %v1142
    %1196 = vmatpush.msra.mxu0 %v1141
    %1197 = vmatpush.msra.mxu0 %v1140
    %1198 = vmatpush.msra.mxu0 %v1139
    %1199 = vmatpush.msra.mxu0 %v1138
    %1200 = vmatpush.msra.mxu0 %v1137
    %1201 = vmatpush.msra.mxu0 %v1136
    %1202 = vmatmul.f32.gmra.mxu0 %v52
    %v1203 = vpop.f32.mrf.mxu0
    %v1204 = vadd.f32 %v1170, %v1203
    %1205 = vmatmul.f32.gmra.mxu0 %v53
    %v1206 = vpop.f32.mrf.mxu0
    %v1207 = vadd.f32 %v1171, %v1206
    %1208 = vmatmul.f32.gmra.mxu0 %v54
    %v1209 = vpop.f32.mrf.mxu0
    %v1210 = vadd.f32 %v1172, %v1209
    %1211 = vmatmul.f32.gmra.mxu0 %v55
    %v1212 = vpop.f32.mrf.mxu0
    %v1213 = vadd.f32 %v1173, %v1212
    %1214 = vmatmul.f32.gmra.mxu0 %v56
    %v1215 = vpop.f32.mrf.mxu0
    %v1216 = vadd.f32 %v1174, %v1215
    %1217 = vmatmul.f32.gmra.mxu0 %v57
    %v1218 = vpop.f32.mrf.mxu0
    %v1219 = vadd.f32 %v1175, %v1218
    %1220 = vmatmul.f32.gmra.mxu0 %v58
    %v1221 = vpop.f32.mrf.mxu0
    %v1222 = vadd.f32 %v1176, %v1221
    %1223 = vmatmul.f32.gmra.mxu0 %v59
    %v1224 = vpop.f32.mrf.mxu0
    %v1225 = vadd.f32 %v1177, %v1224
    %1226 = vmatmul.f32.gmra.mxu0 %v60
    %v1227 = vpop.f32.mrf.mxu0
    %v1228 = vadd.f32 %v1178, %v1227
    %1229 = vmatmul.f32.gmra.mxu0 %v61
    %v1230 = vpop.f32.mrf.mxu0
    %v1231 = vadd.f32 %v1179, %v1230
    %1232 = vmatmul.f32.gmra.mxu0 %v62
    %v1233 = vpop.f32.mrf.mxu0
    %v1234 = vadd.f32 %v1180, %v1233
    %1235 = vmatmul.f32.gmra.mxu0 %v63
    %v1236 = vpop.f32.mrf.mxu0
    %v1237 = vadd.f32 %v1181, %v1236
    %1238 = vmatmul.f32.gmra.mxu0 %v64
    %v1239 = vpop.f32.mrf.mxu0
    %v1240 = vadd.f32 %v1182, %v1239
    %1241 = vmatmul.f32.gmra.mxu0 %v65
    %v1242 = vpop.f32.mrf.mxu0
    %v1243 = vadd.f32 %v1183, %v1242
    %1244 = vmatmul.f32.gmra.mxu0 %v66
    %v1245 = vpop.f32.mrf.mxu0
    %v1246 = vadd.f32 %v1184, %v1245
    %1247 = vmatmul.f32.gmra.mxu0 %v67
    %v1248 = vpop.f32.mrf.mxu0
    %v1249 = vadd.f32 %v1185, %v1248
    %1250 = vdwg.mxu0
    %v1251 = vmax.f32 %v1204, 0.0
    %v1252 = vmax.f32 %v1207, 0.0
    %v1253 = vmax.f32 %v1210, 0.0
    %v1254 = vmax.f32 %v1213, 0.0
    %v1255 = vmax.f32 %v1216, 0.0
    %v1256 = vmax.f32 %v1219, 0.0
    %v1257 = vmax.f32 %v1222, 0.0
    %v1258 = vmax.f32 %v1225, 0.0
    %v1259 = vmax.f32 %v1228, 0.0
    %v1260 = vmax.f32 %v1231, 0.0
    %v1261 = vmax.f32 %v1234, 0.0
    %v1262 = vmax.f32 %v1237, 0.0
    %v1263 = vmax.f32 %v1240, 0.0
    %v1264 = vmax.f32 %v1243, 0.0
    %v1265 = vmax.f32 %v1246, 0.0
    %v1266 = vmax.f32 %v1249, 0.0
    %v1267 = vmul.f32 %v236, %v1136
    %v1268 = vmul.f32 %v236, %v1137
    %v1269 = vmul.f32 %v236, %v1138
    %v1270 = vmul.f32 %v236, %v1139
    %v1271 = vmul.f32 %v236, %v1140
    %v1272 = vmul.f32 %v236, %v1141
    %v1273 = vmul.f32 %v236, %v1142
    %v1274 = vmul.f32 %v236, %v1143
    %v1275 = vmul.f32 %v236, %v1144
    %v1276 = vmul.f32 %v236, %v1145
    %v1277 = vmul.f32 %v236, %v1146
    %v1278 = vmul.f32 %v236, %v1147
    %v1279 = vmul.f32 %v236, %v1148
    %v1280 = vmul.f32 %v236, %v1149
    %v1281 = vmul.f32 %v236, %v1150
    %v1282 = vmul.f32 %v236, %v1151
    %v1283 = vadd.f32 %v1251, %v1267
    %v1284 = vadd.f32 %v1252, %v1268
    %v1285 = vadd.f32 %v1253, %v1269
    %v1286 = vadd.f32 %v1254, %v1270
    %v1287 = vadd.f32 %v1255, %v1271
    %v1288 = vadd.f32 %v1256, %v1272
    %v1289 = vadd.f32 %v1257, %v1273
    %v1290 = vadd.f32 %v1258, %v1274
    %v1291 = vadd.f32 %v1259, %v1275
    %v1292 = vadd.f32 %v1260, %v1276
    %v1293 = vadd.f32 %v1261, %v1277
    %v1294 = vadd.f32 %v1262, %v1278
    %v1295 = vadd.f32 %v1263, %v1279
    %v1296 = vadd.f32 %v1264, %v1280
    %v1297 = vadd.f32 %v1265, %v1281
    %v1298 = vadd.f32 %v1266, %v1282
    %vm1299 = vcmask 64512
    %1300 = vst.msk [vmem:[#allocation2] sm:$0xff] %vm1299, %v1283
    %1301 = vst.msk [vmem:[#allocation2 + $0x8] sm:$0xff] %vm1299, %v1284
    %1302 = vst.msk [vmem:[#allocation2 + $0x10] sm:$0xff] %vm1299, %v1285
    %1303 = vst.msk [vmem:[#allocation2 + $0x18] sm:$0xff] %vm1299, %v1286
    %1304 = vst.msk [vmem:[#allocation2 + $0x20] sm:$0xff] %vm1299, %v1287
    %1305 = vst.msk [vmem:[#allocation2 + $0x28] sm:$0xff] %vm1299, %v1288
    %1306 = vst.msk [vmem:[#allocation2 + $0x30] sm:$0xff] %vm1299, %v1289
    %1307 = vst.msk [vmem:[#allocation2 + $0x38] sm:$0xff] %vm1299, %v1290
    %1308 = vst.msk [vmem:[#allocation2 + $0x40] sm:$0xff] %vm1299, %v1291
    %1309 = vst.msk [vmem:[#allocation2 + $0x48] sm:$0xff] %vm1299, %v1292
    %1310 = vst.msk [vmem:[#allocation2 + $0x50] sm:$0xff] %vm1299, %v1293
    %1311 = vst.msk [vmem:[#allocation2 + $0x58] sm:$0xff] %vm1299, %v1294
    %1312 = vst.msk [vmem:[#allocation2 + $0x60] sm:$0xff] %vm1299, %v1295
    %1313 = vst.msk [vmem:[#allocation2 + $0x68] sm:$0xff] %vm1299, %v1296
    %1314 = vst.msk [vmem:[#allocation2 + $0x70] sm:$0xff] %vm1299, %v1297
    %1315 = vst.msk [vmem:[#allocation2 + $0x78] sm:$0xff] %vm1299, %v1298
    // Predicated region
    $region34: #{tpu_custom_call.1} parent=1 // pred_check
      %p1316 = pneg %p31
    $region35: #{tpu_custom_call.1} parent=1 // pred_check_branch
      %1318 = sbr.rel (%p1316) target = $region37
    $region36: #{tpu_custom_call.1} parent=1 // pred_region
      %v1319 = vld [vmem:[%s5] sm:$0x1]
      %v1320 = vld [vmem:[#allocation4] sm:$0x1]
      %1322 = vset.pattern.permute.xlu0 0
      %1323 = vperm.xlu0 %1322, %v1320
      %v1324 = vpop.permute.xlu0 %1323
      %v1326 = vperm.slane %v1324, 0
      %1327 = vmatpush.msra.mxu0 %v1298
      %1328 = vmatpush.msra.mxu0 %v1297
      %1329 = vmatpush.msra.mxu0 %v1296
      %1330 = vmatpush.msra.mxu0 %v1295
      %1331 = vmatpush.msra.mxu0 %v1294
      %1332 = vmatpush.msra.mxu0 %v1293
      %1333 = vmatpush.msra.mxu0 %v1292
      %1334 = vmatpush.msra.mxu0 %v1291
      %1335 = vmatpush.msra.mxu0 %v1290
      %1336 = vmatpush.msra.mxu0 %v1289
      %1337 = vmatpush.msra.mxu0 %v1288
      %1338 = vmatpush.msra.mxu0 %v1287
      %1339 = vmatpush.msra.mxu0 %v1286
      %1340 = vmatpush.msra.mxu0 %v1285
      %1341 = vmatpush.msra.mxu0 %v1284
      %1342 = vmatpush.msra.mxu0 %v1283
      %1343 = vmatmul.f32.gmra.mxu0 %v1319
      %v1344 = vpop.f32.mrf.mxu0
      %v1345 = vadd.f32 %v1326, %v1344
      %1346 = vdwg.mxu0
      %vm1347 = vcmask 57344
      %1348 = vst.msk [vmem:[#allocation5] sm:$0x1] %vm1347, %v1345
    $region37: #{tpu_custom_call.1} parent=1 // pred_fallthru
      _
    // Predicated region
    $region38: #{tpu_custom_call.1} parent=1 // pred_check
      _
    $region39: #{tpu_custom_call.1} parent=1 // pred_check_branch
      %1350 = sbr.rel (0) target = $region41
    $region40: #{tpu_custom_call.1} parent=1 // pred_region
      %1352 = vsyncadd [#allocation6], 0
      %s1354 = sshll.u32 [#allocation5], 4
      %s1355 = int_to_ptr.vmem [resolvable:$true] %s1354
      %s1356 = sshll.u32 %s7, 4
      %s1357 = int_to_ptr.hbm [resolvable:$true] %s1356
      %1359 = dma.vmem_to_hbm [thread:$0]  %s1355, 16, %s1357, [#allocation6]
    $region41: #{tpu_custom_call.1} parent=1 // pred_fallthru
      _
    // Predicated region
    $region42: #{tpu_custom_call.1} parent=1 // pred_check
      _
    $region43: #{tpu_custom_call.1} parent=1 // pred_check_branch
      %1361 = sbr.rel (0) target = $region45
    $region44: #{tpu_custom_call.1} parent=1 // pred_region
      %1363 = dma.done [#allocation6], 16
    $region45: #{tpu_custom_call.1} parent=1 // pred_fallthru
      _
    %1364 = vsyncpa [#allocation6], 1

</llo_original>
